<compile_context>
chip_gen: v7x
topology: tpu7x:2x2x1
jax: 0.10.0
libtpu: 0.0.40
codegen_flags: <defaults>
</compile_context>

<pallas_src>
import functools

import jax
import jax.numpy as jnp
from jax.experimental import pallas as pl
from jax.experimental.pallas import tpu as pltpu


# Dtype used for the shifted tap copies inside VMEM. f32 uses only relayout paths
# that are universally supported; set to jnp.bfloat16 to halve tap copy bytes.
_TAP_DTYPE = jnp.float32


def _vmem_limit_bytes():
    """Per-generation VMEM budget: capacity minus pipeline/compiler headroom."""
    try:
        cap = int(pltpu.get_tpu_info().vmem_capacity_bytes)
    except Exception:  # pragma: no cover - conservative fallback
        cap = 64 << 20
    # v5e/v6e (128 MiB): ~100 MiB.  v7x (64 MiB): ~48 MiB.
    return max(min(cap - (16 << 20), 100 << 20), 32 << 20)


# ---------------------------------------------------------------------------
# Fused DoubleConv kernel.
#   grid = (batch, output-channel blocks)
#   x  : (1, Cin, H*W)         f32   (NCHW, spatial flattened on lanes)
#   w1 : (9, Cmid, Cin)        bf16  (tap-major, k = ky*3 + kx)
#   b1 : (Cmid, 1)             f32
#   w2 : (9, Cout, Cmid)       bf16
#   b2 : (Cout_blk, 1)         f32
#   o  : (1, Cout_blk, H*W)    f32   (native NCHW once reshaped)
#   y1 : (Cmid, H*W)           bf16  VMEM scratch (stage-1 activation, resident)
# ---------------------------------------------------------------------------
def _double_conv_kernel(x_ref, w1_ref, b1_ref, w2_ref, b2_ref, o_ref, y1_ref,
                        *, H, W):
    HW = H * W
    j = pl.program_id(1)  # output-channel block index

    # Flat-index row/col boundary masks for separable reflect padding.
    lane = jax.lax.broadcasted_iota(jnp.int32, (1, HW), 1)
    if W & (W - 1) == 0:               # power-of-two width: bitwise, no vector div
        col = lane & (W - 1)
    else:
        col = lane % W
    is_c_lo = col == 0
    is_c_hi = col == W - 1
    is_r_lo = lane < W                 # row == 0
    is_r_hi = lane >= HW - W           # row == H - 1

    def shift(v, s):
        # out[..., i] = v[..., (i - s) % HW]  (static s; 2-slice lane concat).
        # A single XLU rotate (pltpu.roll) is a further micro-opt here.
        s = s % HW
        return jnp.concatenate([v[:, HW - s:], v[:, :HW - s]], axis=-1)

    def conv3x3(act, w_ref, bias):
        """3x3 reflect-padded conv on a lane-dense (C_in, H*W) activation.

        Taps never leave the (C, H*W) layout: row/col neighbours are flat lane
        shifts with reflect-boundary selects; each tap feeds one of 9 accumulated
        K=C_in matmuls (bf16 operands, f32 accumulation).
        """
        up = shift(act, W)             # value at row r-1 (interior rows)
        dn = shift(act, -W)            # value at row r+1
        rows = (jnp.where(is_r_lo, dn, up),    # ky=0: reflect row -1 -> row 1
                act,                           # ky=1
                jnp.where(is_r_hi, up, dn))    # ky=2: reflect row H -> row H-2
        acc = None
        for ky in range(3):
            v = rows[ky]
            lf = shift(v, 1)           # value at col c-1 (interior cols)
            rt = shift(v, -1)          # value at col c+1
            cols = (jnp.where(is_c_lo, rt, lf),    # kx=0: reflect col -1 -> col 1
                    v,                             # kx=1
                    jnp.where(is_c_hi, lf, rt))    # kx=2: reflect col W -> col W-2
            for kx in range(3):
                tap = cols[kx].astype(jnp.bfloat16)
                part = jnp.dot(w_ref[ky * 3 + kx], tap,
                               preferred_element_type=jnp.float32)
                acc = part if acc is None else acc + part
        return acc + bias

    def inst_norm_relu(a):
        """Per-channel InstanceNorm (affine=False, eps=1e-5, biased var) + ReLU.

        Two-pass centered variance; both reductions are lane reductions over H*W.
        """
        inv_n = 1.0 / HW
        mean = jnp.sum(a, axis=-1, keepdims=True) * inv_n
        d = a - mean
        var = jnp.sum(d * d, axis=-1, keepdims=True) * inv_n
        return jnp.maximum(d * jax.lax.rsqrt(var + 1e-5), 0.0)

    # ---- stage 1: computed once per image (first channel block) ------------
    @pl.when(j == 0)
    def _():
        x = x_ref[0].astype(_TAP_DTYPE)                      # (Cin, HW)
        a1 = conv3x3(x, w1_ref, b1_ref[...])                 # (Cmid, HW) f32
        y1_ref[...] = inst_norm_relu(a1).astype(jnp.bfloat16)

    # ---- stage 2: this output-channel block; y1 stays resident in VMEM -----
    y1 = y1_ref[...].astype(_TAP_DTYPE)                      # (Cmid, HW)
    a2 = conv3x3(y1, w2_ref, b2_ref[...])                    # (Cout_blk, HW) f32
    o_ref[0] = inst_norm_relu(a2)


# ---------------------------------------------------------------------------
# Wrapper: weight packing + pallas_call.  I/O is NCHW like the PyTorch module.
# ---------------------------------------------------------------------------
def double_conv_forward(x_nchw, params):
    """DoubleConv.forward.  x: (N, Cin, H, W) f32 -> (N, Cout, H, W) f32."""
    w1, b1, w2, b2 = params                     # PyTorch layouts
    N, Cin, H, W = x_nchw.shape
    Cmid = w1.shape[0]
    Cout = w2.shape[0]
    HW = H * W

    # NCHW -> (N, C, H*W): contiguous metadata-only reshape, no HBM transpose.
    x_flat = x_nchw.reshape(N, Cin, HW)

    # Tap-major weight packing (k = ky*3 + kx); bf16 MXU operands.
    w1p = jnp.transpose(w1, (2, 3, 0, 1)).reshape(9, Cmid, Cin).astype(jnp.bfloat16)
    w2p = jnp.transpose(w2, (2, 3, 0, 1)).reshape(9, Cout, Cmid).astype(jnp.bfloat16)
    b1r = b1.reshape(Cmid, 1).astype(jnp.float32)
    b2r = b2.reshape(Cout, 1).astype(jnp.float32)

    # Output-channel tiling (block-local InstanceNorm stats).  Degenerates to a
    # single block at small Cout; caps the stage-2 working set at large Cout.
    cout_blk = Cout if Cout <= 256 else 256
    if Cout % cout_blk:
        cout_blk = Cout
    n_cblk = Cout // cout_blk

    kernel = functools.partial(_double_conv_kernel, H=H, W=W)

    y = pl.pallas_call(
        kernel,
        out_shape=jax.ShapeDtypeStruct((N, Cout, HW), jnp.float32),
        grid=(N, n_cblk),
        in_specs=[
            pl.BlockSpec((1, Cin, HW), lambda n, j: (n, 0, 0)),
            pl.BlockSpec((9, Cmid, Cin), lambda n, j: (0, 0, 0)),
            pl.BlockSpec((Cmid, 1), lambda n, j: (0, 0)),
            pl.BlockSpec((9, cout_blk, Cmid), lambda n, j: (0, j, 0)),
            pl.BlockSpec((cout_blk, 1), lambda n, j: (j, 0)),
        ],
        out_specs=pl.BlockSpec((1, cout_blk, HW), lambda n, j: (n, j, 0)),
        scratch_shapes=[pltpu.VMEM((Cmid, HW), jnp.bfloat16)],
        compiler_params=pltpu.CompilerParams(
            dimension_semantics=("parallel", "arbitrary"),
            vmem_limit_bytes=_vmem_limit_bytes(),
        ),
    )(x_flat, w1p, b1r, w2p, b2r)

    # (N, Cout, H*W) is already NCHW: free reshape, no transpose.
    # NOTE: emit bf16 here instead if downstream layers tolerate bf16 activations.
    return y.reshape(N, Cout, H, W)


# ---------------------------------------------------------------------------
# Pure-JAX high-precision reference (mirrors the PyTorch module exactly)
# ---------------------------------------------------------------------------
def reference_double_conv(x, params):
    w1, b1, w2, b2 = params

    def block(x, w, b):
        n, c, h, wd = x.shape
        xp = jnp.pad(x, ((0, 0), (0, 0), (1, 1), (1, 1)), mode="reflect")
        acc = jnp.zeros((n, w.shape[0], h, wd), jnp.float32)
        for dy in range(3):
            for dx in range(3):
                acc = acc + jnp.einsum(
                    "nchw,oc->nohw",
                    xp[:, :, dy:dy + h, dx:dx + wd],
                    w[:, :, dy, dx],
                    precision="highest",
                )
        acc = acc + b[None, :, None, None]
        mean = acc.mean(axis=(2, 3), keepdims=True)
        var = ((acc - mean) ** 2).mean(axis=(2, 3), keepdims=True)
        return jnp.maximum((acc - mean) * jax.lax.rsqrt(var + 1e-5), 0.0)

    return block(block(x, w1, b1), w2, b2)


# ---------------------------------------------------------------------------
if __name__ == "__main__":
    key = jax.random.PRNGKey(0)
    N, Cin, H, W = 2, 4, 16, 16
    Cout = 8                       # DoubleConv(4, 8) -> mid_channels = 8
    ks = jax.random.split(key, 5)

    x = jax.random.normal(ks[0], (N, Cin, H, W), jnp.float32)
    w1 = 0.1 * jax.random.normal(ks[1], (Cout, Cin, 3, 3), jnp.float32)
    b1 = 0.1 * jax.random.normal(ks[2], (Cout,), jnp.float32)
    w2 = 0.1 * jax.random.normal(ks[3], (Cout, Cout, 3, 3), jnp.float32)
    b2 = 0.1 * jax.random.normal(ks[4], (Cout,), jnp.float32)
    params = (w1, b1, w2, b2)

    out = jax.block_until_ready(double_conv_forward(x, params))
    ref = reference_double_conv(x, params)

    assert out.shape == ref.shape == (N, Cout, H, W), out.shape
    max_err = float(jnp.max(jnp.abs(out - ref)))
    # bf16 MXU operands (f32 accumulation) vs. the f32 precision='highest' reference.
    assert jnp.allclose(out, ref, atol=5e-2, rtol=2e-2), max_err

    print("KERNEL_OK")
</pallas_src>

<mosaic_0001>
module attributes {stable_mosaic.version = 11 : i64} {
  func.func @_double_conv_kernel(%arg0: i32, %arg1: i32, %arg2: memref<1x4x256xf32, #tpu.memory_space<vmem>>, %arg3: memref<9x8x4xbf16, #tpu.memory_space<vmem>>, %arg4: memref<8x1xf32, #tpu.memory_space<vmem>>, %arg5: memref<9x8x8xbf16, #tpu.memory_space<vmem>>, %arg6: memref<8x1xf32, #tpu.memory_space<vmem>>, %arg7: memref<1x8x256xf32, #tpu.memory_space<vmem>>, %arg8: memref<8x256xbf16, #tpu.memory_space<vmem>>) attributes {dimension_semantics = [#tpu.dimension_semantics<parallel>, #tpu.dimension_semantics<arbitrary>], iteration_bounds = array<i64: 2, 1>, scalar_prefetch = 0 : i64, scratch_operands = 1 : i64, tpu.core_type = #tpu.core_type<tc>, window_params = [{transform_indices = @transform_0, window_bounds = array<i64: 1, 4, 256>}, {pipeline_mode = #tpu.pipeline_mode<synchronous>, transform_indices = @transform_1, window_bounds = array<i64: 9, 8, 4>}, {pipeline_mode = #tpu.pipeline_mode<synchronous>, transform_indices = @transform_2, window_bounds = array<i64: 8, 1>}, {transform_indices = @transform_3, window_bounds = array<i64: 9, 8, 8>}, {transform_indices = @transform_4, window_bounds = array<i64: 8, 1>}, {transform_indices = @transform_5, window_bounds = array<i64: 1, 8, 256>}]} {
    %0 = tpu.iota {dimensions = array<i32: 1>} : vector<1x256xi32>
    %c15_i32 = arith.constant 15 : i32
    %1 = vector.broadcast %c15_i32 : i32 to vector<1x256xi32>
    %2 = arith.andi %0, %1 : vector<1x256xi32>
    %c0_i32 = arith.constant 0 : i32
    %3 = vector.broadcast %c0_i32 : i32 to vector<1x256xi32>
    %4 = arith.cmpi eq, %2, %3 : vector<1x256xi32>
    %c15_i32_0 = arith.constant 15 : i32
    %5 = vector.broadcast %c15_i32_0 : i32 to vector<1x256xi32>
    %6 = arith.cmpi eq, %2, %5 : vector<1x256xi32>
    %c16_i32 = arith.constant 16 : i32
    %7 = vector.broadcast %c16_i32 : i32 to vector<1x256xi32>
    %8 = arith.cmpi slt, %0, %7 : vector<1x256xi32>
    %c240_i32 = arith.constant 240 : i32
    %9 = vector.broadcast %c240_i32 : i32 to vector<1x256xi32>
    %10 = arith.cmpi sge, %0, %9 : vector<1x256xi32>
    %c0_i32_1 = arith.constant 0 : i32
    %11 = arith.cmpi eq, %arg1, %c0_i32_1 : i32
    %12 = arith.extui %11 : i1 to i32
    %c0_i32_2 = arith.constant 0 : i32
    %13 = arith.cmpi ne, %12, %c0_i32_2 : i32
    scf.if %13 {
      %c0_42 = arith.constant 0 : index
      %c0_43 = arith.constant 0 : index
      %c0_44 = arith.constant 0 : index
      %132 = vector.load %arg2[%c0_42, %c0_43, %c0_44] : memref<1x4x256xf32, #tpu.memory_space<vmem>>, vector<1x4x256xf32>
      %133 = vector.shape_cast %132 : vector<1x4x256xf32> to vector<4x256xf32>
      %c0_45 = arith.constant 0 : index
      %c0_46 = arith.constant 0 : index
      %134 = vector.load %arg4[%c0_45, %c0_46] : memref<8x1xf32, #tpu.memory_space<vmem>>, vector<8x1xf32>
      %135 = vector.extract_strided_slice %133 {offsets = [0, 240], sizes = [4, 16], strides = [1, 1]} : vector<4x256xf32> to vector<4x16xf32>
      %136 = vector.extract_strided_slice %133 {offsets = [0, 0], sizes = [4, 240], strides = [1, 1]} : vector<4x256xf32> to vector<4x240xf32>
      %137 = tpu.concatenate %135, %136 in 1 : vector<4x16xf32>, vector<4x240xf32> -> vector<4x256xf32>
      %138 = vector.extract_strided_slice %133 {offsets = [0, 16], sizes = [4, 240], strides = [1, 1]} : vector<4x256xf32> to vector<4x240xf32>
      %139 = vector.extract_strided_slice %133 {offsets = [0, 0], sizes = [4, 16], strides = [1, 1]} : vector<4x256xf32> to vector<4x16xf32>
      %140 = tpu.concatenate %138, %139 in 1 : vector<4x240xf32>, vector<4x16xf32> -> vector<4x256xf32>
      %141 = vector.shape_cast %8 : vector<1x256xi1> to vector<1x256xi1>
      %142 = vector.broadcast %141 : vector<1x256xi1> to vector<4x256xi1>
      %143 = arith.select %142, %140, %137 : vector<4x256xi1>, vector<4x256xf32>
      %144 = vector.shape_cast %10 : vector<1x256xi1> to vector<1x256xi1>
      %145 = vector.broadcast %144 : vector<1x256xi1> to vector<4x256xi1>
      %146 = arith.select %145, %137, %140 : vector<4x256xi1>, vector<4x256xf32>
      %147 = vector.extract_strided_slice %143 {offsets = [0, 255], sizes = [4, 1], strides = [1, 1]} : vector<4x256xf32> to vector<4x1xf32>
      %148 = vector.extract_strided_slice %143 {offsets = [0, 0], sizes = [4, 255], strides = [1, 1]} : vector<4x256xf32> to vector<4x255xf32>
      %149 = tpu.concatenate %147, %148 in 1 : vector<4x1xf32>, vector<4x255xf32> -> vector<4x256xf32>
      %150 = vector.extract_strided_slice %143 {offsets = [0, 1], sizes = [4, 255], strides = [1, 1]} : vector<4x256xf32> to vector<4x255xf32>
      %151 = vector.extract_strided_slice %143 {offsets = [0, 0], sizes = [4, 1], strides = [1, 1]} : vector<4x256xf32> to vector<4x1xf32>
      %152 = tpu.concatenate %150, %151 in 1 : vector<4x255xf32>, vector<4x1xf32> -> vector<4x256xf32>
      %153 = vector.shape_cast %4 : vector<1x256xi1> to vector<1x256xi1>
      %154 = vector.broadcast %153 : vector<1x256xi1> to vector<4x256xi1>
      %155 = arith.select %154, %152, %149 : vector<4x256xi1>, vector<4x256xf32>
      %156 = vector.shape_cast %6 : vector<1x256xi1> to vector<1x256xi1>
      %157 = vector.broadcast %156 : vector<1x256xi1> to vector<4x256xi1>
      %158 = arith.select %157, %149, %152 : vector<4x256xi1>, vector<4x256xf32>
      %159 = arith.truncf %155 : vector<4x256xf32> to vector<4x256xbf16>
      %c0_47 = arith.constant 0 : index
      %c0_48 = arith.constant 0 : index
      %c0_49 = arith.constant 0 : index
      %160 = vector.load %arg3[%c0_47, %c0_48, %c0_49] : memref<9x8x4xbf16, #tpu.memory_space<vmem>>, vector<1x8x4xbf16>
      %161 = vector.shape_cast %160 : vector<1x8x4xbf16> to vector<8x4xbf16>
      %cst_50 = arith.constant dense<0.000000e+00> : vector<8x256xf32>
      %162 = tpu.matmul %161, %159, %cst_50 {dimension_numbers = #tpu.dot_dimension_numbers<[1], [0], [0], [1], [0, 0, 1, 1], [], []>} : vector<8x4xbf16>, vector<4x256xbf16>, vector<8x256xf32> -> vector<8x256xf32>
      %163 = arith.truncf %143 : vector<4x256xf32> to vector<4x256xbf16>
      %c1_51 = arith.constant 1 : index
      %c0_52 = arith.constant 0 : index
      %c0_53 = arith.constant 0 : index
      %164 = vector.load %arg3[%c1_51, %c0_52, %c0_53] : memref<9x8x4xbf16, #tpu.memory_space<vmem>>, vector<1x8x4xbf16>
      %165 = vector.shape_cast %164 : vector<1x8x4xbf16> to vector<8x4xbf16>
      %cst_54 = arith.constant dense<0.000000e+00> : vector<8x256xf32>
      %166 = tpu.matmul %165, %163, %cst_54 {dimension_numbers = #tpu.dot_dimension_numbers<[1], [0], [0], [1], [0, 0, 1, 1], [], []>} : vector<8x4xbf16>, vector<4x256xbf16>, vector<8x256xf32> -> vector<8x256xf32>
      %167 = arith.addf %162, %166 : vector<8x256xf32>
      %168 = arith.truncf %158 : vector<4x256xf32> to vector<4x256xbf16>
      %c2_55 = arith.constant 2 : index
      %c0_56 = arith.constant 0 : index
      %c0_57 = arith.constant 0 : index
      %169 = vector.load %arg3[%c2_55, %c0_56, %c0_57] : memref<9x8x4xbf16, #tpu.memory_space<vmem>>, vector<1x8x4xbf16>
      %170 = vector.shape_cast %169 : vector<1x8x4xbf16> to vector<8x4xbf16>
      %cst_58 = arith.constant dense<0.000000e+00> : vector<8x256xf32>
      %171 = tpu.matmul %170, %168, %cst_58 {dimension_numbers = #tpu.dot_dimension_numbers<[1], [0], [0], [1], [0, 0, 1, 1], [], []>} : vector<8x4xbf16>, vector<4x256xbf16>, vector<8x256xf32> -> vector<8x256xf32>
      %172 = arith.addf %167, %171 : vector<8x256xf32>
      %173 = vector.extract_strided_slice %133 {offsets = [0, 255], sizes = [4, 1], strides = [1, 1]} : vector<4x256xf32> to vector<4x1xf32>
      %174 = vector.extract_strided_slice %133 {offsets = [0, 0], sizes = [4, 255], strides = [1, 1]} : vector<4x256xf32> to vector<4x255xf32>
      %175 = tpu.concatenate %173, %174 in 1 : vector<4x1xf32>, vector<4x255xf32> -> vector<4x256xf32>
      %176 = vector.extract_strided_slice %133 {offsets = [0, 1], sizes = [4, 255], strides = [1, 1]} : vector<4x256xf32> to vector<4x255xf32>
      %177 = vector.extract_strided_slice %133 {offsets = [0, 0], sizes = [4, 1], strides = [1, 1]} : vector<4x256xf32> to vector<4x1xf32>
      %178 = tpu.concatenate %176, %177 in 1 : vector<4x255xf32>, vector<4x1xf32> -> vector<4x256xf32>
      %179 = vector.shape_cast %4 : vector<1x256xi1> to vector<1x256xi1>
      %180 = vector.broadcast %179 : vector<1x256xi1> to vector<4x256xi1>
      %181 = arith.select %180, %178, %175 : vector<4x256xi1>, vector<4x256xf32>
      %182 = vector.shape_cast %6 : vector<1x256xi1> to vector<1x256xi1>
      %183 = vector.broadcast %182 : vector<1x256xi1> to vector<4x256xi1>
      %184 = arith.select %183, %175, %178 : vector<4x256xi1>, vector<4x256xf32>
      %185 = arith.truncf %181 : vector<4x256xf32> to vector<4x256xbf16>
      %c3_59 = arith.constant 3 : index
      %c0_60 = arith.constant 0 : index
      %c0_61 = arith.constant 0 : index
      %186 = vector.load %arg3[%c3_59, %c0_60, %c0_61] : memref<9x8x4xbf16, #tpu.memory_space<vmem>>, vector<1x8x4xbf16>
      %187 = vector.shape_cast %186 : vector<1x8x4xbf16> to vector<8x4xbf16>
      %cst_62 = arith.constant dense<0.000000e+00> : vector<8x256xf32>
      %188 = tpu.matmul %187, %185, %cst_62 {dimension_numbers = #tpu.dot_dimension_numbers<[1], [0], [0], [1], [0, 0, 1, 1], [], []>} : vector<8x4xbf16>, vector<4x256xbf16>, vector<8x256xf32> -> vector<8x256xf32>
      %189 = arith.addf %172, %188 : vector<8x256xf32>
      %190 = arith.truncf %133 : vector<4x256xf32> to vector<4x256xbf16>
      %c4_63 = arith.constant 4 : index
      %c0_64 = arith.constant 0 : index
      %c0_65 = arith.constant 0 : index
      %191 = vector.load %arg3[%c4_63, %c0_64, %c0_65] : memref<9x8x4xbf16, #tpu.memory_space<vmem>>, vector<1x8x4xbf16>
      %192 = vector.shape_cast %191 : vector<1x8x4xbf16> to vector<8x4xbf16>
      %cst_66 = arith.constant dense<0.000000e+00> : vector<8x256xf32>
      %193 = tpu.matmul %192, %190, %cst_66 {dimension_numbers = #tpu.dot_dimension_numbers<[1], [0], [0], [1], [0, 0, 1, 1], [], []>} : vector<8x4xbf16>, vector<4x256xbf16>, vector<8x256xf32> -> vector<8x256xf32>
      %194 = arith.addf %189, %193 : vector<8x256xf32>
      %195 = arith.truncf %184 : vector<4x256xf32> to vector<4x256xbf16>
      %c5_67 = arith.constant 5 : index
      %c0_68 = arith.constant 0 : index
      %c0_69 = arith.constant 0 : index
      %196 = vector.load %arg3[%c5_67, %c0_68, %c0_69] : memref<9x8x4xbf16, #tpu.memory_space<vmem>>, vector<1x8x4xbf16>
      %197 = vector.shape_cast %196 : vector<1x8x4xbf16> to vector<8x4xbf16>
      %cst_70 = arith.constant dense<0.000000e+00> : vector<8x256xf32>
      %198 = tpu.matmul %197, %195, %cst_70 {dimension_numbers = #tpu.dot_dimension_numbers<[1], [0], [0], [1], [0, 0, 1, 1], [], []>} : vector<8x4xbf16>, vector<4x256xbf16>, vector<8x256xf32> -> vector<8x256xf32>
      %199 = arith.addf %194, %198 : vector<8x256xf32>
      %200 = vector.extract_strided_slice %146 {offsets = [0, 255], sizes = [4, 1], strides = [1, 1]} : vector<4x256xf32> to vector<4x1xf32>
      %201 = vector.extract_strided_slice %146 {offsets = [0, 0], sizes = [4, 255], strides = [1, 1]} : vector<4x256xf32> to vector<4x255xf32>
      %202 = tpu.concatenate %200, %201 in 1 : vector<4x1xf32>, vector<4x255xf32> -> vector<4x256xf32>
      %203 = vector.extract_strided_slice %146 {offsets = [0, 1], sizes = [4, 255], strides = [1, 1]} : vector<4x256xf32> to vector<4x255xf32>
      %204 = vector.extract_strided_slice %146 {offsets = [0, 0], sizes = [4, 1], strides = [1, 1]} : vector<4x256xf32> to vector<4x1xf32>
      %205 = tpu.concatenate %203, %204 in 1 : vector<4x255xf32>, vector<4x1xf32> -> vector<4x256xf32>
      %206 = vector.shape_cast %4 : vector<1x256xi1> to vector<1x256xi1>
      %207 = vector.broadcast %206 : vector<1x256xi1> to vector<4x256xi1>
      %208 = arith.select %207, %205, %202 : vector<4x256xi1>, vector<4x256xf32>
      %209 = vector.shape_cast %6 : vector<1x256xi1> to vector<1x256xi1>
      %210 = vector.broadcast %209 : vector<1x256xi1> to vector<4x256xi1>
      %211 = arith.select %210, %202, %205 : vector<4x256xi1>, vector<4x256xf32>
      %212 = arith.truncf %208 : vector<4x256xf32> to vector<4x256xbf16>
      %c6_71 = arith.constant 6 : index
      %c0_72 = arith.constant 0 : index
      %c0_73 = arith.constant 0 : index
      %213 = vector.load %arg3[%c6_71, %c0_72, %c0_73] : memref<9x8x4xbf16, #tpu.memory_space<vmem>>, vector<1x8x4xbf16>
      %214 = vector.shape_cast %213 : vector<1x8x4xbf16> to vector<8x4xbf16>
      %cst_74 = arith.constant dense<0.000000e+00> : vector<8x256xf32>
      %215 = tpu.matmul %214, %212, %cst_74 {dimension_numbers = #tpu.dot_dimension_numbers<[1], [0], [0], [1], [0, 0, 1, 1], [], []>} : vector<8x4xbf16>, vector<4x256xbf16>, vector<8x256xf32> -> vector<8x256xf32>
      %216 = arith.addf %199, %215 : vector<8x256xf32>
      %217 = arith.truncf %146 : vector<4x256xf32> to vector<4x256xbf16>
      %c7_75 = arith.constant 7 : index
      %c0_76 = arith.constant 0 : index
      %c0_77 = arith.constant 0 : index
      %218 = vector.load %arg3[%c7_75, %c0_76, %c0_77] : memref<9x8x4xbf16, #tpu.memory_space<vmem>>, vector<1x8x4xbf16>
      %219 = vector.shape_cast %218 : vector<1x8x4xbf16> to vector<8x4xbf16>
      %cst_78 = arith.constant dense<0.000000e+00> : vector<8x256xf32>
      %220 = tpu.matmul %219, %217, %cst_78 {dimension_numbers = #tpu.dot_dimension_numbers<[1], [0], [0], [1], [0, 0, 1, 1], [], []>} : vector<8x4xbf16>, vector<4x256xbf16>, vector<8x256xf32> -> vector<8x256xf32>
      %221 = arith.addf %216, %220 : vector<8x256xf32>
      %222 = arith.truncf %211 : vector<4x256xf32> to vector<4x256xbf16>
      %c8_79 = arith.constant 8 : index
      %c0_80 = arith.constant 0 : index
      %c0_81 = arith.constant 0 : index
      %223 = vector.load %arg3[%c8_79, %c0_80, %c0_81] : memref<9x8x4xbf16, #tpu.memory_space<vmem>>, vector<1x8x4xbf16>
      %224 = vector.shape_cast %223 : vector<1x8x4xbf16> to vector<8x4xbf16>
      %cst_82 = arith.constant dense<0.000000e+00> : vector<8x256xf32>
      %225 = tpu.matmul %224, %222, %cst_82 {dimension_numbers = #tpu.dot_dimension_numbers<[1], [0], [0], [1], [0, 0, 1, 1], [], []>} : vector<8x4xbf16>, vector<4x256xbf16>, vector<8x256xf32> -> vector<8x256xf32>
      %226 = arith.addf %221, %225 : vector<8x256xf32>
      %227 = vector.broadcast %134 : vector<8x1xf32> to vector<8x256xf32>
      %228 = arith.addf %226, %227 : vector<8x256xf32>
      %cst_83 = arith.constant dense<0.000000e+00> : vector<8xf32>
      %229 = vector.multi_reduction <add>, %228, %cst_83 [1] : vector<8x256xf32> to vector<8xf32>
      %230 = vector.shape_cast %229 : vector<8xf32> to vector<8x1xf32>
      %cst_84 = arith.constant 3.906250e-03 : f32
      %231 = vector.broadcast %cst_84 : f32 to vector<8x1xf32>
      %232 = arith.mulf %230, %231 : vector<8x1xf32>
      %233 = vector.broadcast %232 : vector<8x1xf32> to vector<8x256xf32>
      %234 = arith.subf %228, %233 : vector<8x256xf32>
      %235 = arith.mulf %234, %234 : vector<8x256xf32>
      %cst_85 = arith.constant dense<0.000000e+00> : vector<8xf32>
      %236 = vector.multi_reduction <add>, %235, %cst_85 [1] : vector<8x256xf32> to vector<8xf32>
      %237 = vector.shape_cast %236 : vector<8xf32> to vector<8x1xf32>
      %cst_86 = arith.constant 3.906250e-03 : f32
      %238 = vector.broadcast %cst_86 : f32 to vector<8x1xf32>
      %239 = arith.mulf %237, %238 : vector<8x1xf32>
      %cst_87 = arith.constant 9.99999974E-6 : f32
      %240 = vector.broadcast %cst_87 : f32 to vector<8x1xf32>
      %241 = arith.addf %239, %240 : vector<8x1xf32>
      %242 = math.rsqrt %241 : vector<8x1xf32>
      %243 = vector.broadcast %242 : vector<8x1xf32> to vector<8x256xf32>
      %244 = arith.mulf %234, %243 : vector<8x256xf32>
      %cst_88 = arith.constant 0.000000e+00 : f32
      %245 = vector.broadcast %cst_88 : f32 to vector<8x256xf32>
      %246 = arith.maximumf %244, %245 : vector<8x256xf32>
      %247 = arith.truncf %246 : vector<8x256xf32> to vector<8x256xbf16>
      %c0_89 = arith.constant 0 : index
      %c0_90 = arith.constant 0 : index
      %248 = vector.load %arg8[%c0_89, %c0_90] : memref<8x256xbf16, #tpu.memory_space<vmem>>, vector<8x256xbf16>
      tpu.vector_store %arg8[%c0_89, %c0_90], %247 {strides = array<i32>} : memref<8x256xbf16, #tpu.memory_space<vmem>>, vector<8x256xbf16>,
    } else {
    }
    %c0 = arith.constant 0 : index
    %c0_3 = arith.constant 0 : index
    %14 = vector.load %arg8[%c0, %c0_3] : memref<8x256xbf16, #tpu.memory_space<vmem>>, vector<8x256xbf16>
    %15 = arith.extf %14 : vector<8x256xbf16> to vector<8x256xf32>
    %c0_4 = arith.constant 0 : index
    %c0_5 = arith.constant 0 : index
    %16 = vector.load %arg6[%c0_4, %c0_5] : memref<8x1xf32, #tpu.memory_space<vmem>>, vector<8x1xf32>
    %17 = vector.extract_strided_slice %15 {offsets = [0, 240], sizes = [8, 16], strides = [1, 1]} : vector<8x256xf32> to vector<8x16xf32>
    %18 = vector.extract_strided_slice %15 {offsets = [0, 0], sizes = [8, 240], strides = [1, 1]} : vector<8x256xf32> to vector<8x240xf32>
    %19 = tpu.concatenate %17, %18 in 1 : vector<8x16xf32>, vector<8x240xf32> -> vector<8x256xf32>
    %20 = vector.extract_strided_slice %15 {offsets = [0, 16], sizes = [8, 240], strides = [1, 1]} : vector<8x256xf32> to vector<8x240xf32>
    %21 = vector.extract_strided_slice %15 {offsets = [0, 0], sizes = [8, 16], strides = [1, 1]} : vector<8x256xf32> to vector<8x16xf32>
    %22 = tpu.concatenate %20, %21 in 1 : vector<8x240xf32>, vector<8x16xf32> -> vector<8x256xf32>
    %23 = vector.shape_cast %8 : vector<1x256xi1> to vector<1x256xi1>
    %24 = vector.broadcast %23 : vector<1x256xi1> to vector<8x256xi1>
    %25 = arith.select %24, %22, %19 : vector<8x256xi1>, vector<8x256xf32>
    %26 = vector.shape_cast %10 : vector<1x256xi1> to vector<1x256xi1>
    %27 = vector.broadcast %26 : vector<1x256xi1> to vector<8x256xi1>
    %28 = arith.select %27, %19, %22 : vector<8x256xi1>, vector<8x256xf32>
    %29 = vector.extract_strided_slice %25 {offsets = [0, 255], sizes = [8, 1], strides = [1, 1]} : vector<8x256xf32> to vector<8x1xf32>
    %30 = vector.extract_strided_slice %25 {offsets = [0, 0], sizes = [8, 255], strides = [1, 1]} : vector<8x256xf32> to vector<8x255xf32>
    %31 = tpu.concatenate %29, %30 in 1 : vector<8x1xf32>, vector<8x255xf32> -> vector<8x256xf32>
    %32 = vector.extract_strided_slice %25 {offsets = [0, 1], sizes = [8, 255], strides = [1, 1]} : vector<8x256xf32> to vector<8x255xf32>
    %33 = vector.extract_strided_slice %25 {offsets = [0, 0], sizes = [8, 1], strides = [1, 1]} : vector<8x256xf32> to vector<8x1xf32>
    %34 = tpu.concatenate %32, %33 in 1 : vector<8x255xf32>, vector<8x1xf32> -> vector<8x256xf32>
    %35 = vector.shape_cast %4 : vector<1x256xi1> to vector<1x256xi1>
    %36 = vector.broadcast %35 : vector<1x256xi1> to vector<8x256xi1>
    %37 = arith.select %36, %34, %31 : vector<8x256xi1>, vector<8x256xf32>
    %38 = vector.shape_cast %6 : vector<1x256xi1> to vector<1x256xi1>
    %39 = vector.broadcast %38 : vector<1x256xi1> to vector<8x256xi1>
    %40 = arith.select %39, %31, %34 : vector<8x256xi1>, vector<8x256xf32>
    %41 = arith.truncf %37 : vector<8x256xf32> to vector<8x256xbf16>
    %c0_6 = arith.constant 0 : index
    %c0_7 = arith.constant 0 : index
    %c0_8 = arith.constant 0 : index
    %42 = vector.load %arg5[%c0_6, %c0_7, %c0_8] : memref<9x8x8xbf16, #tpu.memory_space<vmem>>, vector<1x8x8xbf16>
    %43 = vector.shape_cast %42 : vector<1x8x8xbf16> to vector<8x8xbf16>
    %cst = arith.constant dense<0.000000e+00> : vector<8x256xf32>
    %44 = tpu.matmul %43, %41, %cst {dimension_numbers = #tpu.dot_dimension_numbers<[1], [0], [0], [1], [0, 0, 1, 1], [], []>} : vector<8x8xbf16>, vector<8x256xbf16>, vector<8x256xf32> -> vector<8x256xf32>
    %45 = arith.truncf %25 : vector<8x256xf32> to vector<8x256xbf16>
    %c1 = arith.constant 1 : index
    %c0_9 = arith.constant 0 : index
    %c0_10 = arith.constant 0 : index
    %46 = vector.load %arg5[%c1, %c0_9, %c0_10] : memref<9x8x8xbf16, #tpu.memory_space<vmem>>, vector<1x8x8xbf16>
    %47 = vector.shape_cast %46 : vector<1x8x8xbf16> to vector<8x8xbf16>
    %cst_11 = arith.constant dense<0.000000e+00> : vector<8x256xf32>
    %48 = tpu.matmul %47, %45, %cst_11 {dimension_numbers = #tpu.dot_dimension_numbers<[1], [0], [0], [1], [0, 0, 1, 1], [], []>} : vector<8x8xbf16>, vector<8x256xbf16>, vector<8x256xf32> -> vector<8x256xf32>
    %49 = arith.addf %44, %48 : vector<8x256xf32>
    %50 = arith.truncf %40 : vector<8x256xf32> to vector<8x256xbf16>
    %c2 = arith.constant 2 : index
    %c0_12 = arith.constant 0 : index
    %c0_13 = arith.constant 0 : index
    %51 = vector.load %arg5[%c2, %c0_12, %c0_13] : memref<9x8x8xbf16, #tpu.memory_space<vmem>>, vector<1x8x8xbf16>
    %52 = vector.shape_cast %51 : vector<1x8x8xbf16> to vector<8x8xbf16>
    %cst_14 = arith.constant dense<0.000000e+00> : vector<8x256xf32>
    %53 = tpu.matmul %52, %50, %cst_14 {dimension_numbers = #tpu.dot_dimension_numbers<[1], [0], [0], [1], [0, 0, 1, 1], [], []>} : vector<8x8xbf16>, vector<8x256xbf16>, vector<8x256xf32> -> vector<8x256xf32>
    %54 = arith.addf %49, %53 : vector<8x256xf32>
    %55 = vector.extract_strided_slice %15 {offsets = [0, 255], sizes = [8, 1], strides = [1, 1]} : vector<8x256xf32> to vector<8x1xf32>
    %56 = vector.extract_strided_slice %15 {offsets = [0, 0], sizes = [8, 255], strides = [1, 1]} : vector<8x256xf32> to vector<8x255xf32>
    %57 = tpu.concatenate %55, %56 in 1 : vector<8x1xf32>, vector<8x255xf32> -> vector<8x256xf32>
    %58 = vector.extract_strided_slice %15 {offsets = [0, 1], sizes = [8, 255], strides = [1, 1]} : vector<8x256xf32> to vector<8x255xf32>
    %59 = vector.extract_strided_slice %15 {offsets = [0, 0], sizes = [8, 1], strides = [1, 1]} : vector<8x256xf32> to vector<8x1xf32>
    %60 = tpu.concatenate %58, %59 in 1 : vector<8x255xf32>, vector<8x1xf32> -> vector<8x256xf32>
    %61 = vector.shape_cast %4 : vector<1x256xi1> to vector<1x256xi1>
    %62 = vector.broadcast %61 : vector<1x256xi1> to vector<8x256xi1>
    %63 = arith.select %62, %60, %57 : vector<8x256xi1>, vector<8x256xf32>
    %64 = vector.shape_cast %6 : vector<1x256xi1> to vector<1x256xi1>
    %65 = vector.broadcast %64 : vector<1x256xi1> to vector<8x256xi1>
    %66 = arith.select %65, %57, %60 : vector<8x256xi1>, vector<8x256xf32>
    %67 = arith.truncf %63 : vector<8x256xf32> to vector<8x256xbf16>
    %c3 = arith.constant 3 : index
    %c0_15 = arith.constant 0 : index
    %c0_16 = arith.constant 0 : index
    %68 = vector.load %arg5[%c3, %c0_15, %c0_16] : memref<9x8x8xbf16, #tpu.memory_space<vmem>>, vector<1x8x8xbf16>
    %69 = vector.shape_cast %68 : vector<1x8x8xbf16> to vector<8x8xbf16>
    %cst_17 = arith.constant dense<0.000000e+00> : vector<8x256xf32>
    %70 = tpu.matmul %69, %67, %cst_17 {dimension_numbers = #tpu.dot_dimension_numbers<[1], [0], [0], [1], [0, 0, 1, 1], [], []>} : vector<8x8xbf16>, vector<8x256xbf16>, vector<8x256xf32> -> vector<8x256xf32>
    %71 = arith.addf %54, %70 : vector<8x256xf32>
    %72 = arith.truncf %15 : vector<8x256xf32> to vector<8x256xbf16>
    %c4 = arith.constant 4 : index
    %c0_18 = arith.constant 0 : index
    %c0_19 = arith.constant 0 : index
    %73 = vector.load %arg5[%c4, %c0_18, %c0_19] : memref<9x8x8xbf16, #tpu.memory_space<vmem>>, vector<1x8x8xbf16>
    %74 = vector.shape_cast %73 : vector<1x8x8xbf16> to vector<8x8xbf16>
    %cst_20 = arith.constant dense<0.000000e+00> : vector<8x256xf32>
    %75 = tpu.matmul %74, %72, %cst_20 {dimension_numbers = #tpu.dot_dimension_numbers<[1], [0], [0], [1], [0, 0, 1, 1], [], []>} : vector<8x8xbf16>, vector<8x256xbf16>, vector<8x256xf32> -> vector<8x256xf32>
    %76 = arith.addf %71, %75 : vector<8x256xf32>
    %77 = arith.truncf %66 : vector<8x256xf32> to vector<8x256xbf16>
    %c5 = arith.constant 5 : index
    %c0_21 = arith.constant 0 : index
    %c0_22 = arith.constant 0 : index
    %78 = vector.load %arg5[%c5, %c0_21, %c0_22] : memref<9x8x8xbf16, #tpu.memory_space<vmem>>, vector<1x8x8xbf16>
    %79 = vector.shape_cast %78 : vector<1x8x8xbf16> to vector<8x8xbf16>
    %cst_23 = arith.constant dense<0.000000e+00> : vector<8x256xf32>
    %80 = tpu.matmul %79, %77, %cst_23 {dimension_numbers = #tpu.dot_dimension_numbers<[1], [0], [0], [1], [0, 0, 1, 1], [], []>} : vector<8x8xbf16>, vector<8x256xbf16>, vector<8x256xf32> -> vector<8x256xf32>
    %81 = arith.addf %76, %80 : vector<8x256xf32>
    %82 = vector.extract_strided_slice %28 {offsets = [0, 255], sizes = [8, 1], strides = [1, 1]} : vector<8x256xf32> to vector<8x1xf32>
    %83 = vector.extract_strided_slice %28 {offsets = [0, 0], sizes = [8, 255], strides = [1, 1]} : vector<8x256xf32> to vector<8x255xf32>
    %84 = tpu.concatenate %82, %83 in 1 : vector<8x1xf32>, vector<8x255xf32> -> vector<8x256xf32>
    %85 = vector.extract_strided_slice %28 {offsets = [0, 1], sizes = [8, 255], strides = [1, 1]} : vector<8x256xf32> to vector<8x255xf32>
    %86 = vector.extract_strided_slice %28 {offsets = [0, 0], sizes = [8, 1], strides = [1, 1]} : vector<8x256xf32> to vector<8x1xf32>
    %87 = tpu.concatenate %85, %86 in 1 : vector<8x255xf32>, vector<8x1xf32> -> vector<8x256xf32>
    %88 = vector.shape_cast %4 : vector<1x256xi1> to vector<1x256xi1>
    %89 = vector.broadcast %88 : vector<1x256xi1> to vector<8x256xi1>
    %90 = arith.select %89, %87, %84 : vector<8x256xi1>, vector<8x256xf32>
    %91 = vector.shape_cast %6 : vector<1x256xi1> to vector<1x256xi1>
    %92 = vector.broadcast %91 : vector<1x256xi1> to vector<8x256xi1>
    %93 = arith.select %92, %84, %87 : vector<8x256xi1>, vector<8x256xf32>
    %94 = arith.truncf %90 : vector<8x256xf32> to vector<8x256xbf16>
    %c6 = arith.constant 6 : index
    %c0_24 = arith.constant 0 : index
    %c0_25 = arith.constant 0 : index
    %95 = vector.load %arg5[%c6, %c0_24, %c0_25] : memref<9x8x8xbf16, #tpu.memory_space<vmem>>, vector<1x8x8xbf16>
    %96 = vector.shape_cast %95 : vector<1x8x8xbf16> to vector<8x8xbf16>
    %cst_26 = arith.constant dense<0.000000e+00> : vector<8x256xf32>
    %97 = tpu.matmul %96, %94, %cst_26 {dimension_numbers = #tpu.dot_dimension_numbers<[1], [0], [0], [1], [0, 0, 1, 1], [], []>} : vector<8x8xbf16>, vector<8x256xbf16>, vector<8x256xf32> -> vector<8x256xf32>
    %98 = arith.addf %81, %97 : vector<8x256xf32>
    %99 = arith.truncf %28 : vector<8x256xf32> to vector<8x256xbf16>
    %c7 = arith.constant 7 : index
    %c0_27 = arith.constant 0 : index
    %c0_28 = arith.constant 0 : index
    %100 = vector.load %arg5[%c7, %c0_27, %c0_28] : memref<9x8x8xbf16, #tpu.memory_space<vmem>>, vector<1x8x8xbf16>
    %101 = vector.shape_cast %100 : vector<1x8x8xbf16> to vector<8x8xbf16>
    %cst_29 = arith.constant dense<0.000000e+00> : vector<8x256xf32>
    %102 = tpu.matmul %101, %99, %cst_29 {dimension_numbers = #tpu.dot_dimension_numbers<[1], [0], [0], [1], [0, 0, 1, 1], [], []>} : vector<8x8xbf16>, vector<8x256xbf16>, vector<8x256xf32> -> vector<8x256xf32>
    %103 = arith.addf %98, %102 : vector<8x256xf32>
    %104 = arith.truncf %93 : vector<8x256xf32> to vector<8x256xbf16>
    %c8 = arith.constant 8 : index
    %c0_30 = arith.constant 0 : index
    %c0_31 = arith.constant 0 : index
    %105 = vector.load %arg5[%c8, %c0_30, %c0_31] : memref<9x8x8xbf16, #tpu.memory_space<vmem>>, vector<1x8x8xbf16>
    %106 = vector.shape_cast %105 : vector<1x8x8xbf16> to vector<8x8xbf16>
    %cst_32 = arith.constant dense<0.000000e+00> : vector<8x256xf32>
    %107 = tpu.matmul %106, %104, %cst_32 {dimension_numbers = #tpu.dot_dimension_numbers<[1], [0], [0], [1], [0, 0, 1, 1], [], []>} : vector<8x8xbf16>, vector<8x256xbf16>, vector<8x256xf32> -> vector<8x256xf32>
    %108 = arith.addf %103, %107 : vector<8x256xf32>
    %109 = vector.broadcast %16 : vector<8x1xf32> to vector<8x256xf32>
    %110 = arith.addf %108, %109 : vector<8x256xf32>
    %cst_33 = arith.constant dense<0.000000e+00> : vector<8xf32>
    %111 = vector.multi_reduction <add>, %110, %cst_33 [1] : vector<8x256xf32> to vector<8xf32>
    %112 = vector.shape_cast %111 : vector<8xf32> to vector<8x1xf32>
    %cst_34 = arith.constant 3.906250e-03 : f32
    %113 = vector.broadcast %cst_34 : f32 to vector<8x1xf32>
    %114 = arith.mulf %112, %113 : vector<8x1xf32>
    %115 = vector.broadcast %114 : vector<8x1xf32> to vector<8x256xf32>
    %116 = arith.subf %110, %115 : vector<8x256xf32>
    %117 = arith.mulf %116, %116 : vector<8x256xf32>
    %cst_35 = arith.constant dense<0.000000e+00> : vector<8xf32>
    %118 = vector.multi_reduction <add>, %117, %cst_35 [1] : vector<8x256xf32> to vector<8xf32>
    %119 = vector.shape_cast %118 : vector<8xf32> to vector<8x1xf32>
    %cst_36 = arith.constant 3.906250e-03 : f32
    %120 = vector.broadcast %cst_36 : f32 to vector<8x1xf32>
    %121 = arith.mulf %119, %120 : vector<8x1xf32>
    %cst_37 = arith.constant 9.99999974E-6 : f32
    %122 = vector.broadcast %cst_37 : f32 to vector<8x1xf32>
    %123 = arith.addf %121, %122 : vector<8x1xf32>
    %124 = math.rsqrt %123 : vector<8x1xf32>
    %125 = vector.broadcast %124 : vector<8x1xf32> to vector<8x256xf32>
    %126 = arith.mulf %116, %125 : vector<8x256xf32>
    %cst_38 = arith.constant 0.000000e+00 : f32
    %127 = vector.broadcast %cst_38 : f32 to vector<8x256xf32>
    %128 = arith.maximumf %126, %127 : vector<8x256xf32>
    %c0_39 = arith.constant 0 : index
    %c0_40 = arith.constant 0 : index
    %c0_41 = arith.constant 0 : index
    %129 = vector.load %arg7[%c0_39, %c0_40, %c0_41] : memref<1x8x256xf32, #tpu.memory_space<vmem>>, vector<1x8x256xf32>
    %130 = vector.shape_cast %129 : vector<1x8x256xf32> to vector<8x256xf32>
    %131 = vector.shape_cast %128 : vector<8x256xf32> to vector<1x8x256xf32>
    tpu.vector_store %arg7[%c0_39, %c0_40, %c0_41], %131 {strides = array<i32>} : memref<1x8x256xf32, #tpu.memory_space<vmem>>, vector<1x8x256xf32>,
    return
  }
  func.func @transform_0(%arg0: i32, %arg1: i32) -> (i32, i32, i32) {
    %c0_i32 = arith.constant 0 : i32
    %c0_i32_0 = arith.constant 0 : i32
    %c0_i32_1 = arith.constant 0 : i32
    return %arg0, %c0_i32, %c0_i32_0 : i32, i32, i32
  }
  func.func @transform_1(%arg0: i32, %arg1: i32) -> (i32, i32, i32) {
    %c0_i32 = arith.constant 0 : i32
    %c0_i32_0 = arith.constant 0 : i32
    %c0_i32_1 = arith.constant 0 : i32
    %c0_i32_2 = arith.constant 0 : i32
    return %c0_i32, %c0_i32_0, %c0_i32_1 : i32, i32, i32
  }
  func.func @transform_2(%arg0: i32, %arg1: i32) -> (i32, i32) {
    %c0_i32 = arith.constant 0 : i32
    %c0_i32_0 = arith.constant 0 : i32
    %c0_i32_1 = arith.constant 0 : i32
    return %c0_i32, %c0_i32_0 : i32, i32
  }
  func.func @transform_3(%arg0: i32, %arg1: i32) -> (i32, i32, i32) {
    %c0_i32 = arith.constant 0 : i32
    %c0_i32_0 = arith.constant 0 : i32
    %c0_i32_1 = arith.constant 0 : i32
    return %c0_i32, %arg1, %c0_i32_0 : i32, i32, i32
  }
  func.func @transform_4(%arg0: i32, %arg1: i32) -> (i32, i32) {
    %c0_i32 = arith.constant 0 : i32
    %c0_i32_0 = arith.constant 0 : i32
    return %arg1, %c0_i32 : i32, i32
  }
  func.func @transform_5(%arg0: i32, %arg1: i32) -> (i32, i32, i32) {
    %c0_i32 = arith.constant 0 : i32
    %c0_i32_0 = arith.constant 0 : i32
    return %arg0, %arg1, %c0_i32 : i32, i32, i32
  }
}

</mosaic_0001>

<llo_original>
// kernel: tpu_custom_call.1
$region0: #{tpu_custom_call.1}
  #allocation0 [shape = 'u32[]', space=smem, size = 0x4, offset = 0x4, fixed_abs, tag = 'smem constant byte address 0x4 - core index']
  #allocation1 [shape = 'u32[144,128]{1,0:T(1,128)}', space=vmem, size = 0x12000, scoped, tag = 'internal scratch']
  #allocation2 [shape = 'bf16[8,256]{1,0:T(8,128)(2,1)}', space=vmem, size = 0x1000, scoped, tag = 'scratch operand']
  %s0 = inlined_call_operand.vmem [shape: f32[2,4,256], index: 0, kind: input, shape index: {}]
  %s1 = inlined_call_operand.vmem [shape: bf16[9,8,4], index: 1, kind: input, shape index: {}]
  %s2 = inlined_call_operand.vmem [shape: f32[8,1], index: 2, kind: input, shape index: {}]
  %s3 = inlined_call_operand.vmem [shape: bf16[9,8,8], index: 3, kind: input, shape index: {}]
  %s4 = inlined_call_operand.vmem [shape: f32[8,1], index: 4, kind: input, shape index: {}]
  %s5 = inlined_call_operand.hbm [shape: f32[2,8,256], index: 5, kind: output, shape index: {}]
  %s6 = sld [smem:[#allocation0]]
  $region57: #{tpu_custom_call.1} parent=0
    _
  %s8 = ssub.s32 1, %s6
  %s9 = scalar_select 0, %s8, %s6
  $region1: #{tpu_custom_call.1} parent=0
    #allocation3 [shape = 'u8[16384]{0}', space=vmem, size = 0x4000, scoped, tag = 'output window, operand 0']
    #allocation4 [shape = 's32[2]{0}', space=sflag, size = 0x8, scoped, tag = 'scoped memory for tpu_custom_call.1']
    %10 = vsyncpa [#allocation4], 0
    %s11 = scalar_lea.sflag [#allocation4], 1
    %12 = vsyncpa %s11, 0
    loop: start=0, step=1, limit=4
    $region2: #{tpu_custom_call.1} parent=1 // loop_pre_header
      _
    $region3: #{tpu_custom_call.1} parent=1 // loop_header
      %s14 = sphi 0, %s18
      %p15 = scmp.ge.s32.totalorder %s14, 4
      %s21 = sphi 0, %s33
      %s22 = sphi 0, %s29
      %s23 = sphi 0, %s21
      %s24 = sphi 0, %s22
      %s25 = sphi 0, %s23
      %s26 = sphi 0, %s24
      %s36 = sphi 0, %s38
      %s39 = sphi 0, %s36
      %s40 = sphi 0, %s39
      %s56 = sphi 0, %s40
      %s60 = sphi 0, %s60
      %s62 = sphi 0, %s60
      %s63 = sphi 0, %s62
      %s77 = sphi 0, %s63
      %s81 = sphi 0, %s81
      %s83 = sphi 0, %s81
      %s84 = sphi 0, %s83
      %s98 = sphi 0, %s84
      %s104 = sphi 0, %s106
      %s107 = sphi 0, %s104
      %s108 = sphi 0, %s107
      %s124 = sphi 0, %s108
      %s130 = sphi 0, %s132
      %s133 = sphi 0, %s130
      %s134 = sphi 0, %s133
      %s150 = sphi 0, %s134
      %s158 = sphi 0, %s160
      %s161 = sphi 0, %s158
      %s162 = sphi 0, %s161
      %s178 = sphi 0, %s162
    $region4: #{tpu_custom_call.1} parent=1 // loop_header_branch
      %17 = sbr.rel (%p15) target = $region8
    $region5: #{tpu_custom_call.1} parent=1 // loop_body
      %s19 = ssub.s32 %s14, 1
      %s20 = ssub.s32 %s14, 2
      %s27 = sadd.s32 1, %s22
      %p28 = scmp.ge.s32.totalorder %s27, 1
      %s29 = scalar_select %p28, 0, %s27
      %s30 = sadd.s32 1, %s21
      %s31 = scalar_select %p28, %s30, %s21
      %p32 = scmp.ge.s32.totalorder %s31, 2
      %s33 = scalar_select %p32, 0, %s31
      %s34 = ssub.s32 %s21, %s33
      %p35 = scmp.eq.s32.totalorder %s34, 0
      %s37 = sadd.s32 %s36, 1
      %s38 = scalar_select %p35, %s36, %s37
      %p41 = pneg %p35
      %p42 = scmp.eq.s32.totalorder %s14, 1
      %p43 = por %p41, %p42
      %p44 = scmp.ne.s32.totalorder %s36, %s39
      %p45 = scmp.eq.s32.totalorder %s14, 0
      %p46 = por %p44, %p45
      %p47 = scmp.ne.s32.totalorder %s36, %s39
      %p48 = scmp.eq.s32.totalorder %s19, 1
      %p49 = por %p47, %p48
      %p50 = scmp.ne.s32.totalorder %s39, %s40
      %p51 = scmp.eq.s32.totalorder %s19, 0
      %p52 = por %p50, %p51
      %p53 = scmp.ne.s32.totalorder %s39, %s40
      %p54 = scmp.eq.s32.totalorder %s20, 1
      %p55 = por %p53, %p54
      %p57 = scmp.ne.s32.totalorder %s40, %s56
      %p58 = scmp.eq.s32.totalorder %s20, 0
      %p59 = por %p57, %p58
      %s61 = sadd.s32 %s60, 1
      %p64 = scmp.eq.s32.totalorder %s14, 1
      %p65 = scmp.ne.s32.totalorder %s60, %s62
      %p66 = scmp.eq.s32.totalorder %s14, 0
      %p67 = por %p65, %p66
      %p68 = scmp.ne.s32.totalorder %s60, %s62
      %p69 = scmp.eq.s32.totalorder %s19, 1
      %p70 = por %p68, %p69
      %p71 = scmp.ne.s32.totalorder %s62, %s63
      %p72 = scmp.eq.s32.totalorder %s19, 0
      %p73 = por %p71, %p72
      %p74 = scmp.ne.s32.totalorder %s62, %s63
      %p75 = scmp.eq.s32.totalorder %s20, 1
      %p76 = por %p74, %p75
      %p78 = scmp.ne.s32.totalorder %s63, %s77
      %p79 = scmp.eq.s32.totalorder %s20, 0
      %p80 = por %p78, %p79
      %s82 = sadd.s32 %s81, 1
      %p85 = scmp.eq.s32.totalorder %s14, 1
      %p86 = scmp.ne.s32.totalorder %s81, %s83
      %p87 = scmp.eq.s32.totalorder %s14, 0
      %p88 = por %p86, %p87
      %p89 = scmp.ne.s32.totalorder %s81, %s83
      %p90 = scmp.eq.s32.totalorder %s19, 1
      %p91 = por %p89, %p90
      %p92 = scmp.ne.s32.totalorder %s83, %s84
      %p93 = scmp.eq.s32.totalorder %s19, 0
      %p94 = por %p92, %p93
      %p95 = scmp.ne.s32.totalorder %s83, %s84
      %p96 = scmp.eq.s32.totalorder %s20, 1
      %p97 = por %p95, %p96
      %p99 = scmp.ne.s32.totalorder %s84, %s98
      %p100 = scmp.eq.s32.totalorder %s20, 0
      %p101 = por %p99, %p100
      %s102 = ssub.s32 %s22, %s29
      %p103 = scmp.eq.s32.totalorder %s102, 0
      %s105 = sadd.s32 %s104, 1
      %s106 = scalar_select %p103, %s104, %s105
      %p109 = pneg %p103
      %p110 = scmp.eq.s32.totalorder %s14, 1
      %p111 = por %p109, %p110
      %p112 = scmp.ne.s32.totalorder %s104, %s107
      %p113 = scmp.eq.s32.totalorder %s14, 0
      %p114 = por %p112, %p113
      %p115 = scmp.ne.s32.totalorder %s104, %s107
      %p116 = scmp.eq.s32.totalorder %s19, 1
      %p117 = por %p115, %p116
      %p118 = scmp.ne.s32.totalorder %s107, %s108
      %p119 = scmp.eq.s32.totalorder %s19, 0
      %p120 = por %p118, %p119
      %p121 = scmp.ne.s32.totalorder %s107, %s108
      %p122 = scmp.eq.s32.totalorder %s20, 1
      %p123 = por %p121, %p122
      %p125 = scmp.ne.s32.totalorder %s108, %s124
      %p126 = scmp.eq.s32.totalorder %s20, 0
      %p127 = por %p125, %p126
      %s128 = ssub.s32 %s22, %s29
      %p129 = scmp.eq.s32.totalorder %s128, 0
      %s131 = sadd.s32 %s130, 1
      %s132 = scalar_select %p129, %s130, %s131
      %p135 = pneg %p129
      %p136 = scmp.eq.s32.totalorder %s14, 1
      %p137 = por %p135, %p136
      %p138 = scmp.ne.s32.totalorder %s130, %s133
      %p139 = scmp.eq.s32.totalorder %s14, 0
      %p140 = por %p138, %p139
      %p141 = scmp.ne.s32.totalorder %s130, %s133
      %p142 = scmp.eq.s32.totalorder %s19, 1
      %p143 = por %p141, %p142
      %p144 = scmp.ne.s32.totalorder %s133, %s134
      %p145 = scmp.eq.s32.totalorder %s19, 0
      %p146 = por %p144, %p145
      %p147 = scmp.ne.s32.totalorder %s133, %s134
      %p148 = scmp.eq.s32.totalorder %s20, 1
      %p149 = por %p147, %p148
      %p151 = scmp.ne.s32.totalorder %s134, %s150
      %p152 = scmp.eq.s32.totalorder %s20, 0
      %p153 = por %p151, %p152
      %s154 = ssub.s32 %s21, %s33
      %s155 = ssub.s32 %s22, %s29
      %s156 = sor.u32 %s154, %s155
      %p157 = scmp.eq.s32.totalorder %s156, 0
      %s159 = sadd.s32 %s158, 1
      %s160 = scalar_select %p157, %s158, %s159
      %p163 = pneg %p157
      %p164 = scmp.eq.s32.totalorder %s14, 1
      %p165 = por %p163, %p164
      %p166 = scmp.ne.s32.totalorder %s158, %s161
      %p167 = scmp.eq.s32.totalorder %s14, 0
      %p168 = por %p166, %p167
      %p169 = scmp.ne.s32.totalorder %s158, %s161
      %p170 = scmp.eq.s32.totalorder %s19, 1
      %p171 = por %p169, %p170
      %p172 = scmp.ne.s32.totalorder %s161, %s162
      %p173 = scmp.eq.s32.totalorder %s19, 0
      %p174 = por %p172, %p173
      %p175 = scmp.ne.s32.totalorder %s161, %s162
      %p176 = scmp.eq.s32.totalorder %s20, 1
      %p177 = por %p175, %p176
      %p179 = scmp.ne.s32.totalorder %s162, %s178
      %p180 = scmp.eq.s32.totalorder %s20, 0
      %p181 = por %p179, %p180
      %p182 = scmp.le.s32.totalorder 1, %s14
      %p183 = scmp.lt.s32.totalorder %s14, 3
      %p184 = pnand %p182, %p183
      %p185 = pneg %p184
      // Predicated region
      $region9: #{tpu_custom_call.1} parent=5 // pred_check
        _
      $region10: #{tpu_custom_call.1} parent=5 // pred_check_branch
        %187 = sbr.rel (%p184) target = $region12
      $region11: #{tpu_custom_call.1} parent=5 // pred_region
        %s188 = ssub.s32 %s14, 1
        // Predicated region
        $region13: #{tpu_custom_call.1} parent=11 // pred_check
          %p189 = pneg %p73
        $region14: #{tpu_custom_call.1} parent=11 // pred_check_branch
          %191 = sbr.rel (%p189) target = $region16
        $region15: #{tpu_custom_call.1} parent=11 // pred_region
          _
        $region16: #{tpu_custom_call.1} parent=11 // pred_fallthru
          _
        // Predicated region
        $region17: #{tpu_custom_call.1} parent=11 // pred_check
          %p192 = pneg %p94
        $region18: #{tpu_custom_call.1} parent=11 // pred_check_branch
          %194 = sbr.rel (%p192) target = $region20
        $region19: #{tpu_custom_call.1} parent=11 // pred_region
          _
        $region20: #{tpu_custom_call.1} parent=11 // pred_fallthru
          _
        // Predicated region
        $region21: #{tpu_custom_call.1} parent=11 // pred_check
          %p195 = pneg %p120
        $region22: #{tpu_custom_call.1} parent=11 // pred_check_branch
          %197 = sbr.rel (%p195) target = $region24
        $region23: #{tpu_custom_call.1} parent=11 // pred_region
          %p198 = scmp.lt.s32.totalorder %s24, 0
          %s199 = scalar_select %p198, %s24, 0
          %s200 = smul.addr %s199, 4
          %s201 = scalar_lea.vmem %s3, %s200
        $region24: #{tpu_custom_call.1} parent=11 // pred_fallthru
          _
        // Predicated region
        $region25: #{tpu_custom_call.1} parent=11 // pred_check
          %p202 = pneg %p146
        $region26: #{tpu_custom_call.1} parent=11 // pred_check_branch
          %204 = sbr.rel (%p202) target = $region28
        $region27: #{tpu_custom_call.1} parent=11 // pred_region
          %p205 = scmp.lt.s32.totalorder %s24, 0
          %s206 = scalar_select %p205, %s24, 0
          %s207 = smul.addr %s206, 8
          %s208 = scalar_lea.vmem %s4, %s207
        $region28: #{tpu_custom_call.1} parent=11 // pred_fallthru
          _
      $region12: #{tpu_custom_call.1} parent=5 // pred_fallthru
        _
      %p209 = scmp.lt.s32.totalorder %s14, 2
      // Predicated region
      $region29: #{tpu_custom_call.1} parent=5 // pred_check
        %p210 = pneg %p209
      $region30: #{tpu_custom_call.1} parent=5 // pred_check_branch
        %212 = sbr.rel (%p210) target = $region32
      $region31: #{tpu_custom_call.1} parent=5 // pred_region
        // Predicated region
        $region33: #{tpu_custom_call.1} parent=31 // pred_check
          %p213 = pneg %p46
        $region34: #{tpu_custom_call.1} parent=31 // pred_check_branch
          %215 = sbr.rel (%p213) target = $region36
        $region35: #{tpu_custom_call.1} parent=31 // pred_region
          %p216 = scmp.lt.s32.totalorder %s21, 1
          %s217 = scalar_select %p216, %s21, 1
          %s218 = smul.addr %s217, 2
          %s219 = smul.addr %s218, 4
          %s220 = scalar_lea.vmem %s0, %s219
        $region36: #{tpu_custom_call.1} parent=31 // pred_fallthru
          _
      $region32: #{tpu_custom_call.1} parent=5 // pred_fallthru
        _
      %p221 = scmp.le.s32.totalorder 1, %s14
      %p222 = scmp.lt.s32.totalorder %s14, 3
      %p223 = pnand %p221, %p222
      %p224 = pneg %p223
      // Predicated region
      $region37: #{tpu_custom_call.1} parent=5 // pred_check
        _
      $region38: #{tpu_custom_call.1} parent=5 // pred_check_branch
        %226 = sbr.rel (%p223) target = $region40
      $region39: #{tpu_custom_call.1} parent=5 // pred_region
        %s227 = ssub.s32 %s14, 1
        %p228 = scmp.lt.s32.totalorder %s23, 1
        %s229 = scalar_select %p228, %s23, 1
        %s230 = smul.addr %s229, 2
        %s231 = smul.addr %s230, 4
        %s232 = scalar_lea.vmem %s0, %s231
        %p233 = pneg %p52
        %p234 = pneg %p49
        %p235 = pneg %p73
        %p236 = pneg %p70
        %p237 = pneg %p94
        %p238 = pneg %p91
        %p239 = scmp.lt.s32.totalorder %s24, 0
        %s240 = scalar_select %p239, %s24, 0
        %s241 = smul.addr %s240, 4
        %s242 = scalar_lea.vmem %s3, %s241
        %p243 = pneg %p120
        %p244 = pneg %p117
        %p245 = scmp.lt.s32.totalorder %s24, 0
        %s246 = scalar_select %p245, %s24, 0
        %s247 = smul.addr %s246, 8
        %s248 = scalar_lea.vmem %s4, %s247
        %p249 = pneg %p146
        %p250 = pneg %p143
        %p251 = pneg %p174
        %p252 = pneg %p171
        %s253 = sand.u32 %s161, 1
        %s254 = scalar_lea.sflag [#allocation4], %s253
        %s255 = sand.u32 %s161, 1
        %s256 = smul.addr %s255, 16
        %s257 = scalar_lea.vmem [#allocation3], %s256
        %p258 = scmp.lt.s32.totalorder %s23, 1
        %s259 = scalar_select %p258, %s23, 1
        %s260 = smul.addr %s259, 2
        %s261 = smul.addr %s260, 4
        %s262 = scalar_lea.vmem %s0, %s261
        %p263 = scmp.lt.s32.totalorder %s24, 0
        %s264 = scalar_select %p263, %s24, 0
        %s265 = smul.addr %s264, 4
        %s266 = scalar_lea.vmem %s3, %s265
        %p267 = scmp.lt.s32.totalorder %s24, 0
        %s268 = scalar_select %p267, %s24, 0
        %s269 = smul.addr %s268, 8
        %s270 = scalar_lea.vmem %s4, %s269
        %v272 = vlaneseq
        %v273 = vand.u32 %v272, 127
        %v274 = vadd.s32 %v273, 128
        %v275 = vand.u32 %v273, 15
        %v276 = vand.u32 %v274, 15
        %vm277 = vcmp.eq.s32.totalorder %v275, 0
        %vm278 = vcmp.eq.s32.totalorder %v276, 0
        %vm279 = vcmp.eq.s32.totalorder %v275, 15
        %vm280 = vcmp.eq.s32.totalorder %v276, 15
        %vm281 = vcmp.lt.s32.totalorder %v273, 16
        %vm282 = vcmp.lt.s32.totalorder %v274, 16
        %vm283 = vcmp.ge.s32.totalorder %v273, 240
        %vm284 = vcmp.ge.s32.totalorder %v274, 240
        %p285 = scmp.eq.s32.totalorder %s24, 0
        // Predicated region
        $region41: #{tpu_custom_call.1} parent=39 // pred_check
          %p286 = pneg %p285
        $region42: #{tpu_custom_call.1} parent=39 // pred_check_branch
          %288 = sbr.rel (%p286) target = $region44
        $region43: #{tpu_custom_call.1} parent=39 // pred_region
          %v289 = vld [vmem:[%s262] sm:$0xff]
          %v290 = vld [vmem:[%s2] sm:$0xff]
          %v292 = vcombine.high %v289, %v289
          %293 = vrot.lane.b32.xlu0 %v292, 16
          %v294 = vpop.permute.xlu0 %293
          %296 = vrot.lane.b32.xlu0 %v289, 16
          %v297 = vpop.permute.xlu0 %296
          %vm298 = vcmask 130048
          %v299 = vsel %vm298, %v297, %v294
          %v302 = vsel %vm298, %v294, %v297
          %303 = vrot.lane.b32.xlu0 %v289, 112
          %v304 = vpop.permute.xlu0 %303
          %305 = vrot.lane.b32.xlu0 %v292, 112
          %v306 = vpop.permute.xlu0 %305
          %vm307 = vcmask 916480
          %v308 = vsel %vm307, %v304, %v306
          %v312 = vsel %vm307, %v306, %v304
          %v313 = vsel %vm281, 1, 0
          %v314 = vsel %vm282, 1, 0
          %vm315 = vcmp.eq.s32.totalorder %v313, 1
          %vm316 = vcmp.eq.s32.totalorder %v314, 1
          %v317 = vsel %vm315, %v308, %v302
          %v318 = vsel %vm316, %v312, %v299
          %v319 = vsel %vm283, 1, 0
          %v320 = vsel %vm284, 1, 0
          %vm321 = vcmp.eq.s32.totalorder %v319, 1
          %vm322 = vcmp.eq.s32.totalorder %v320, 1
          %v323 = vsel %vm321, %v302, %v308
          %v324 = vsel %vm322, %v299, %v312
          %326 = vrot.lane.b32.xlu0 %v318, 1
          %v327 = vpop.permute.xlu0 %326
          %330 = vrot.lane.b32.xlu0 %v317, 1
          %v331 = vpop.permute.xlu0 %330
          %vm332 = vcmask 7168
          %v333 = vsel %vm332, %v331, %v327
          %v336 = vsel %vm332, %v327, %v331
          %337 = vrot.lane.b32.xlu0 %v317, 127
          %v338 = vpop.permute.xlu0 %337
          %339 = vrot.lane.b32.xlu0 %v318, 127
          %v340 = vpop.permute.xlu0 %339
          %vm341 = vcmask 1039360
          %v342 = vsel %vm341, %v338, %v340
          %v346 = vsel %vm341, %v340, %v338
          %v347 = vsel %vm277, 1, 0
          %v348 = vsel %vm278, 1, 0
          %vm349 = vcmp.eq.s32.totalorder %v347, 1
          %vm350 = vcmp.eq.s32.totalorder %v348, 1
          %v351 = vsel %vm349, %v342, %v336
          %v352 = vsel %vm350, %v346, %v333
          %v353 = vsel %vm279, 1, 0
          %v354 = vsel %vm280, 1, 0
          %vm355 = vcmp.eq.s32.totalorder %v353, 1
          %vm356 = vcmp.eq.s32.totalorder %v354, 1
          %v357 = vsel %vm355, %v336, %v342
          %v358 = vsel %vm356, %v333, %v346
          %v359 = vpack.c.bf16 %v351, %v351
          %v360 = vpack.c.bf16 %v352, %v352
          %v361 = vld [vmem:[%s1] sm:$0xf]
          %v362 = vpack.c.bf16 %v317, %v317
          %v363 = vpack.c.bf16 %v318, %v318
          %s364 = scalar_lea.vmem %s1, 4
          %v365 = vld [vmem:[%s364] sm:$0xf]
          %vm366 = vcmask 31744
          %v368 = vsel %vm366, %v365, 0
          %vm370 = vcmask 1041408
          %v372 = vsel %vm370, %v362, 0
          %v375 = vsel %vm370, %v363, 0
          %377 = vmatprep.subr.bf16.mxu0 %v375
          %378 = vmatpush1.bf16.msra.mxu0 %v372
          %379 = vmatprep.subr.bf16.mxu0 0
          %380 = vmatpush1.bf16.msra.mxu0 0
          %381 = vmatprep.subr.bf16.mxu0 0
          %382 = vmatpush1.bf16.msra.mxu0 0
          %383 = vmatprep.subr.bf16.mxu0 0
          %384 = vmatpush1.bf16.msra.mxu0 0
          %385 = vmatprep.subr.bf16.mxu0 0
          %386 = vmatpush1.bf16.msra.mxu0 0
          %387 = vmatprep.subr.bf16.mxu0 0
          %388 = vmatpush1.bf16.msra.mxu0 0
          %389 = vmatprep.subr.bf16.mxu0 0
          %390 = vmatpush1.bf16.msra.mxu0 0
          %391 = vmatprep.subr.bf16.mxu0 0
          %392 = vmatpush1.bf16.msra.mxu0 0
          %393 = vmatprep.subr.bf16.mxu0 0
          %394 = vmatpush1.bf16.msra.mxu0 0
          %395 = vmatprep.subr.bf16.mxu0 0
          %396 = vmatpush1.bf16.msra.mxu0 0
          %397 = vmatprep.subr.bf16.mxu0 0
          %398 = vmatpush1.bf16.msra.mxu0 0
          %399 = vmatprep.subr.bf16.mxu0 0
          %400 = vmatpush1.bf16.msra.mxu0 0
          %401 = vmatprep.subr.bf16.mxu0 0
          %402 = vmatpush1.bf16.msra.mxu0 0
          %403 = vmatprep.subr.bf16.mxu0 0
          %404 = vmatpush1.bf16.msra.mxu0 0
          %405 = vmatprep.subr.bf16.mxu0 0
          %406 = vmatpush1.bf16.msra.mxu0 0
          %407 = vmatprep.subr.bf16.mxu0 0
          %408 = vmatpush1.bf16.msra.mxu0 0
          %409 = vmatprep.mubr.bf16.mxu0 0
          %410 = vmatmul.mubr.bf16.gmra.mrb[0].mxu0 %v368
          %v411 = vpop.f32.mrb[0].mxu0
          %v412 = vadd.f32 0.0, %v411
          %v413 = vpop.f32.mrb[0].mxu0
          %v414 = vadd.f32 0.0, %v413
          %v415 = vpop.f32.mrb[0].mxu0
          %v416 = vpop.f32.mrb[0].mxu0
          %417 = vdwg.mxu0
          %v419 = vsel %vm366, %v361, 0
          %v422 = vsel %vm370, %v359, 0
          %v425 = vsel %vm370, %v360, 0
          %427 = vmatprep.subr.bf16.mxu0 %v425
          %428 = vmatpush1.bf16.msra.mxu0 %v422
          %429 = vmatprep.subr.bf16.mxu0 0
          %430 = vmatpush1.bf16.msra.mxu0 0
          %431 = vmatprep.subr.bf16.mxu0 0
          %432 = vmatpush1.bf16.msra.mxu0 0
          %433 = vmatprep.subr.bf16.mxu0 0
          %434 = vmatpush1.bf16.msra.mxu0 0
          %435 = vmatprep.subr.bf16.mxu0 0
          %436 = vmatpush1.bf16.msra.mxu0 0
          %437 = vmatprep.subr.bf16.mxu0 0
          %438 = vmatpush1.bf16.msra.mxu0 0
          %439 = vmatprep.subr.bf16.mxu0 0
          %440 = vmatpush1.bf16.msra.mxu0 0
          %441 = vmatprep.subr.bf16.mxu0 0
          %442 = vmatpush1.bf16.msra.mxu0 0
          %443 = vmatprep.subr.bf16.mxu0 0
          %444 = vmatpush1.bf16.msra.mxu0 0
          %445 = vmatprep.subr.bf16.mxu0 0
          %446 = vmatpush1.bf16.msra.mxu0 0
          %447 = vmatprep.subr.bf16.mxu0 0
          %448 = vmatpush1.bf16.msra.mxu0 0
          %449 = vmatprep.subr.bf16.mxu0 0
          %450 = vmatpush1.bf16.msra.mxu0 0
          %451 = vmatprep.subr.bf16.mxu0 0
          %452 = vmatpush1.bf16.msra.mxu0 0
          %453 = vmatprep.subr.bf16.mxu0 0
          %454 = vmatpush1.bf16.msra.mxu0 0
          %455 = vmatprep.subr.bf16.mxu0 0
          %456 = vmatpush1.bf16.msra.mxu0 0
          %457 = vmatprep.subr.bf16.mxu0 0
          %458 = vmatpush1.bf16.msra.mxu0 0
          %459 = vmatprep.mubr.bf16.mxu0 0
          %460 = vmatmul.mubr.bf16.gmra.mrb[0].mxu0 %v419
          %v461 = vpop.f32.mrb[0].mxu0
          %v462 = vadd.f32 %v412, %v461
          %v463 = vpop.f32.mrb[0].mxu0
          %v464 = vadd.f32 %v414, %v463
          %v465 = vpop.f32.mrb[0].mxu0
          %v466 = vpop.f32.mrb[0].mxu0
          %467 = vdwg.mxu0
          %v468 = vpack.c.bf16 %v357, %v357
          %v469 = vpack.c.bf16 %v358, %v358
          %s470 = scalar_lea.vmem %s1, 8
          %v471 = vld [vmem:[%s470] sm:$0xf]
          %v473 = vsel %vm366, %v471, 0
          %v476 = vsel %vm370, %v468, 0
          %v479 = vsel %vm370, %v469, 0
          %481 = vmatprep.subr.bf16.mxu0 %v479
          %482 = vmatpush1.bf16.msra.mxu0 %v476
          %483 = vmatprep.subr.bf16.mxu0 0
          %484 = vmatpush1.bf16.msra.mxu0 0
          %485 = vmatprep.subr.bf16.mxu0 0
          %486 = vmatpush1.bf16.msra.mxu0 0
          %487 = vmatprep.subr.bf16.mxu0 0
          %488 = vmatpush1.bf16.msra.mxu0 0
          %489 = vmatprep.subr.bf16.mxu0 0
          %490 = vmatpush1.bf16.msra.mxu0 0
          %491 = vmatprep.subr.bf16.mxu0 0
          %492 = vmatpush1.bf16.msra.mxu0 0
          %493 = vmatprep.subr.bf16.mxu0 0
          %494 = vmatpush1.bf16.msra.mxu0 0
          %495 = vmatprep.subr.bf16.mxu0 0
          %496 = vmatpush1.bf16.msra.mxu0 0
          %497 = vmatprep.subr.bf16.mxu0 0
          %498 = vmatpush1.bf16.msra.mxu0 0
          %499 = vmatprep.subr.bf16.mxu0 0
          %500 = vmatpush1.bf16.msra.mxu0 0
          %501 = vmatprep.subr.bf16.mxu0 0
          %502 = vmatpush1.bf16.msra.mxu0 0
          %503 = vmatprep.subr.bf16.mxu0 0
          %504 = vmatpush1.bf16.msra.mxu0 0
          %505 = vmatprep.subr.bf16.mxu0 0
          %506 = vmatpush1.bf16.msra.mxu0 0
          %507 = vmatprep.subr.bf16.mxu0 0
          %508 = vmatpush1.bf16.msra.mxu0 0
          %509 = vmatprep.subr.bf16.mxu0 0
          %510 = vmatpush1.bf16.msra.mxu0 0
          %511 = vmatprep.subr.bf16.mxu0 0
          %512 = vmatpush1.bf16.msra.mxu0 0
          %513 = vmatprep.mubr.bf16.mxu0 0
          %514 = vmatmul.mubr.bf16.gmra.mrb[0].mxu0 %v473
          %v515 = vpop.f32.mrb[0].mxu0
          %v516 = vadd.f32 0.0, %v515
          %v517 = vpop.f32.mrb[0].mxu0
          %v518 = vadd.f32 0.0, %v517
          %v519 = vpop.f32.mrb[0].mxu0
          %v520 = vpop.f32.mrb[0].mxu0
          %521 = vdwg.mxu0
          %v522 = vadd.f32 %v462, %v516
          %v523 = vadd.f32 %v464, %v518
          %524 = vrot.lane.b32.xlu0 %v292, 1
          %v525 = vpop.permute.xlu0 %524
          %527 = vrot.lane.b32.xlu0 %v289, 1
          %v528 = vpop.permute.xlu0 %527
          %v529 = vsel %vm332, %v528, %v525
          %v532 = vsel %vm332, %v525, %v528
          %533 = vrot.lane.b32.xlu0 %v289, 127
          %v534 = vpop.permute.xlu0 %533
          %535 = vrot.lane.b32.xlu0 %v292, 127
          %v536 = vpop.permute.xlu0 %535
          %v537 = vsel %vm341, %v534, %v536
          %v541 = vsel %vm341, %v536, %v534
          %v542 = vsel %vm349, %v537, %v532
          %v543 = vsel %vm350, %v541, %v529
          %v544 = vsel %vm355, %v532, %v537
          %v545 = vsel %vm356, %v529, %v541
          %v546 = vpack.c.bf16 %v542, %v542
          %v547 = vpack.c.bf16 %v543, %v543
          %s548 = scalar_lea.vmem %s1, 12
          %v549 = vld [vmem:[%s548] sm:$0xf]
          %v551 = vsel %vm366, %v549, 0
          %v554 = vsel %vm370, %v546, 0
          %v557 = vsel %vm370, %v547, 0
          %559 = vmatprep.subr.bf16.mxu0 %v557
          %560 = vmatpush1.bf16.msra.mxu0 %v554
          %561 = vmatprep.subr.bf16.mxu0 0
          %562 = vmatpush1.bf16.msra.mxu0 0
          %563 = vmatprep.subr.bf16.mxu0 0
          %564 = vmatpush1.bf16.msra.mxu0 0
          %565 = vmatprep.subr.bf16.mxu0 0
          %566 = vmatpush1.bf16.msra.mxu0 0
          %567 = vmatprep.subr.bf16.mxu0 0
          %568 = vmatpush1.bf16.msra.mxu0 0
          %569 = vmatprep.subr.bf16.mxu0 0
          %570 = vmatpush1.bf16.msra.mxu0 0
          %571 = vmatprep.subr.bf16.mxu0 0
          %572 = vmatpush1.bf16.msra.mxu0 0
          %573 = vmatprep.subr.bf16.mxu0 0
          %574 = vmatpush1.bf16.msra.mxu0 0
          %575 = vmatprep.subr.bf16.mxu0 0
          %576 = vmatpush1.bf16.msra.mxu0 0
          %577 = vmatprep.subr.bf16.mxu0 0
          %578 = vmatpush1.bf16.msra.mxu0 0
          %579 = vmatprep.subr.bf16.mxu0 0
          %580 = vmatpush1.bf16.msra.mxu0 0
          %581 = vmatprep.subr.bf16.mxu0 0
          %582 = vmatpush1.bf16.msra.mxu0 0
          %583 = vmatprep.subr.bf16.mxu0 0
          %584 = vmatpush1.bf16.msra.mxu0 0
          %585 = vmatprep.subr.bf16.mxu0 0
          %586 = vmatpush1.bf16.msra.mxu0 0
          %587 = vmatprep.subr.bf16.mxu0 0
          %588 = vmatpush1.bf16.msra.mxu0 0
          %589 = vmatprep.subr.bf16.mxu0 0
          %590 = vmatpush1.bf16.msra.mxu0 0
          %591 = vmatprep.mubr.bf16.mxu0 0
          %592 = vmatmul.mubr.bf16.gmra.mrb[0].mxu0 %v551
          %v593 = vpop.f32.mrb[0].mxu0
          %v594 = vadd.f32 0.0, %v593
          %v595 = vpop.f32.mrb[0].mxu0
          %v596 = vadd.f32 0.0, %v595
          %v597 = vpop.f32.mrb[0].mxu0
          %v598 = vpop.f32.mrb[0].mxu0
          %599 = vdwg.mxu0
          %v600 = vadd.f32 %v522, %v594
          %v601 = vadd.f32 %v523, %v596
          %v603 = vpack.c.bf16 %v289, %v289
          %v604 = vpack.c.bf16 %v292, %v292
          %s605 = scalar_lea.vmem %s1, 16
          %v606 = vld [vmem:[%s605] sm:$0xf]
          %v608 = vsel %vm366, %v606, 0
          %v611 = vsel %vm370, %v603, 0
          %v614 = vsel %vm370, %v604, 0
          %616 = vmatprep.subr.bf16.mxu0 %v614
          %617 = vmatpush1.bf16.msra.mxu0 %v611
          %618 = vmatprep.subr.bf16.mxu0 0
          %619 = vmatpush1.bf16.msra.mxu0 0
          %620 = vmatprep.subr.bf16.mxu0 0
          %621 = vmatpush1.bf16.msra.mxu0 0
          %622 = vmatprep.subr.bf16.mxu0 0
          %623 = vmatpush1.bf16.msra.mxu0 0
          %624 = vmatprep.subr.bf16.mxu0 0
          %625 = vmatpush1.bf16.msra.mxu0 0
          %626 = vmatprep.subr.bf16.mxu0 0
          %627 = vmatpush1.bf16.msra.mxu0 0
          %628 = vmatprep.subr.bf16.mxu0 0
          %629 = vmatpush1.bf16.msra.mxu0 0
          %630 = vmatprep.subr.bf16.mxu0 0
          %631 = vmatpush1.bf16.msra.mxu0 0
          %632 = vmatprep.subr.bf16.mxu0 0
          %633 = vmatpush1.bf16.msra.mxu0 0
          %634 = vmatprep.subr.bf16.mxu0 0
          %635 = vmatpush1.bf16.msra.mxu0 0
          %636 = vmatprep.subr.bf16.mxu0 0
          %637 = vmatpush1.bf16.msra.mxu0 0
          %638 = vmatprep.subr.bf16.mxu0 0
          %639 = vmatpush1.bf16.msra.mxu0 0
          %640 = vmatprep.subr.bf16.mxu0 0
          %641 = vmatpush1.bf16.msra.mxu0 0
          %642 = vmatprep.subr.bf16.mxu0 0
          %643 = vmatpush1.bf16.msra.mxu0 0
          %644 = vmatprep.subr.bf16.mxu0 0
          %645 = vmatpush1.bf16.msra.mxu0 0
          %646 = vmatprep.subr.bf16.mxu0 0
          %647 = vmatpush1.bf16.msra.mxu0 0
          %648 = vmatprep.mubr.bf16.mxu0 0
          %649 = vmatmul.mubr.bf16.gmra.mrb[0].mxu0 %v608
          %v650 = vpop.f32.mrb[0].mxu0
          %v651 = vadd.f32 0.0, %v650
          %v652 = vpop.f32.mrb[0].mxu0
          %v653 = vadd.f32 0.0, %v652
          %v654 = vpop.f32.mrb[0].mxu0
          %v655 = vpop.f32.mrb[0].mxu0
          %656 = vdwg.mxu0
          %v657 = vadd.f32 %v600, %v651
          %v658 = vadd.f32 %v601, %v653
          %v659 = vpack.c.bf16 %v544, %v544
          %v660 = vpack.c.bf16 %v545, %v545
          %s661 = scalar_lea.vmem %s1, 20
          %v662 = vld [vmem:[%s661] sm:$0xf]
          %v664 = vsel %vm366, %v662, 0
          %v667 = vsel %vm370, %v659, 0
          %v670 = vsel %vm370, %v660, 0
          %672 = vmatprep.subr.bf16.mxu0 %v670
          %673 = vmatpush1.bf16.msra.mxu0 %v667
          %674 = vmatprep.subr.bf16.mxu0 0
          %675 = vmatpush1.bf16.msra.mxu0 0
          %676 = vmatprep.subr.bf16.mxu0 0
          %677 = vmatpush1.bf16.msra.mxu0 0
          %678 = vmatprep.subr.bf16.mxu0 0
          %679 = vmatpush1.bf16.msra.mxu0 0
          %680 = vmatprep.subr.bf16.mxu0 0
          %681 = vmatpush1.bf16.msra.mxu0 0
          %682 = vmatprep.subr.bf16.mxu0 0
          %683 = vmatpush1.bf16.msra.mxu0 0
          %684 = vmatprep.subr.bf16.mxu0 0
          %685 = vmatpush1.bf16.msra.mxu0 0
          %686 = vmatprep.subr.bf16.mxu0 0
          %687 = vmatpush1.bf16.msra.mxu0 0
          %688 = vmatprep.subr.bf16.mxu0 0
          %689 = vmatpush1.bf16.msra.mxu0 0
          %690 = vmatprep.subr.bf16.mxu0 0
          %691 = vmatpush1.bf16.msra.mxu0 0
          %692 = vmatprep.subr.bf16.mxu0 0
          %693 = vmatpush1.bf16.msra.mxu0 0
          %694 = vmatprep.subr.bf16.mxu0 0
          %695 = vmatpush1.bf16.msra.mxu0 0
          %696 = vmatprep.subr.bf16.mxu0 0
          %697 = vmatpush1.bf16.msra.mxu0 0
          %698 = vmatprep.subr.bf16.mxu0 0
          %699 = vmatpush1.bf16.msra.mxu0 0
          %700 = vmatprep.subr.bf16.mxu0 0
          %701 = vmatpush1.bf16.msra.mxu0 0
          %702 = vmatprep.subr.bf16.mxu0 0
          %703 = vmatpush1.bf16.msra.mxu0 0
          %704 = vmatprep.mubr.bf16.mxu0 0
          %705 = vmatmul.mubr.bf16.gmra.mrb[0].mxu0 %v664
          %v706 = vpop.f32.mrb[0].mxu0
          %v707 = vadd.f32 0.0, %v706
          %v708 = vpop.f32.mrb[0].mxu0
          %v709 = vadd.f32 0.0, %v708
          %v710 = vpop.f32.mrb[0].mxu0
          %v711 = vpop.f32.mrb[0].mxu0
          %712 = vdwg.mxu0
          %v713 = vadd.f32 %v657, %v707
          %v714 = vadd.f32 %v658, %v709
          %716 = vrot.lane.b32.xlu0 %v324, 1
          %v717 = vpop.permute.xlu0 %716
          %720 = vrot.lane.b32.xlu0 %v323, 1
          %v721 = vpop.permute.xlu0 %720
          %v722 = vsel %vm332, %v721, %v717
          %v725 = vsel %vm332, %v717, %v721
          %726 = vrot.lane.b32.xlu0 %v323, 127
          %v727 = vpop.permute.xlu0 %726
          %728 = vrot.lane.b32.xlu0 %v324, 127
          %v729 = vpop.permute.xlu0 %728
          %v730 = vsel %vm341, %v727, %v729
          %v734 = vsel %vm341, %v729, %v727
          %v735 = vsel %vm349, %v730, %v725
          %v736 = vsel %vm350, %v734, %v722
          %v737 = vsel %vm355, %v725, %v730
          %v738 = vsel %vm356, %v722, %v734
          %v739 = vpack.c.bf16 %v735, %v735
          %v740 = vpack.c.bf16 %v736, %v736
          %s741 = scalar_lea.vmem %s1, 24
          %v742 = vld [vmem:[%s741] sm:$0xf]
          %v744 = vsel %vm366, %v742, 0
          %v747 = vsel %vm370, %v739, 0
          %v750 = vsel %vm370, %v740, 0
          %752 = vmatprep.subr.bf16.mxu0 %v750
          %753 = vmatpush1.bf16.msra.mxu0 %v747
          %754 = vmatprep.subr.bf16.mxu0 0
          %755 = vmatpush1.bf16.msra.mxu0 0
          %756 = vmatprep.subr.bf16.mxu0 0
          %757 = vmatpush1.bf16.msra.mxu0 0
          %758 = vmatprep.subr.bf16.mxu0 0
          %759 = vmatpush1.bf16.msra.mxu0 0
          %760 = vmatprep.subr.bf16.mxu0 0
          %761 = vmatpush1.bf16.msra.mxu0 0
          %762 = vmatprep.subr.bf16.mxu0 0
          %763 = vmatpush1.bf16.msra.mxu0 0
          %764 = vmatprep.subr.bf16.mxu0 0
          %765 = vmatpush1.bf16.msra.mxu0 0
          %766 = vmatprep.subr.bf16.mxu0 0
          %767 = vmatpush1.bf16.msra.mxu0 0
          %768 = vmatprep.subr.bf16.mxu0 0
          %769 = vmatpush1.bf16.msra.mxu0 0
          %770 = vmatprep.subr.bf16.mxu0 0
          %771 = vmatpush1.bf16.msra.mxu0 0
          %772 = vmatprep.subr.bf16.mxu0 0
          %773 = vmatpush1.bf16.msra.mxu0 0
          %774 = vmatprep.subr.bf16.mxu0 0
          %775 = vmatpush1.bf16.msra.mxu0 0
          %776 = vmatprep.subr.bf16.mxu0 0
          %777 = vmatpush1.bf16.msra.mxu0 0
          %778 = vmatprep.subr.bf16.mxu0 0
          %779 = vmatpush1.bf16.msra.mxu0 0
          %780 = vmatprep.subr.bf16.mxu0 0
          %781 = vmatpush1.bf16.msra.mxu0 0
          %782 = vmatprep.subr.bf16.mxu0 0
          %783 = vmatpush1.bf16.msra.mxu0 0
          %784 = vmatprep.mubr.bf16.mxu0 0
          %785 = vmatmul.mubr.bf16.gmra.mrb[0].mxu0 %v744
          %v786 = vpop.f32.mrb[0].mxu0
          %v787 = vadd.f32 0.0, %v786
          %v788 = vpop.f32.mrb[0].mxu0
          %v789 = vadd.f32 0.0, %v788
          %v790 = vpop.f32.mrb[0].mxu0
          %v791 = vpop.f32.mrb[0].mxu0
          %792 = vdwg.mxu0
          %v793 = vadd.f32 %v713, %v787
          %v794 = vadd.f32 %v714, %v789
          %v795 = vpack.c.bf16 %v323, %v323
          %v796 = vpack.c.bf16 %v324, %v324
          %s797 = scalar_lea.vmem %s1, 28
          %v798 = vld [vmem:[%s797] sm:$0xf]
          %v800 = vsel %vm366, %v798, 0
          %v803 = vsel %vm370, %v795, 0
          %v806 = vsel %vm370, %v796, 0
          %808 = vmatprep.subr.bf16.mxu0 %v806
          %809 = vmatpush1.bf16.msra.mxu0 %v803
          %810 = vmatprep.subr.bf16.mxu0 0
          %811 = vmatpush1.bf16.msra.mxu0 0
          %812 = vmatprep.subr.bf16.mxu0 0
          %813 = vmatpush1.bf16.msra.mxu0 0
          %814 = vmatprep.subr.bf16.mxu0 0
          %815 = vmatpush1.bf16.msra.mxu0 0
          %816 = vmatprep.subr.bf16.mxu0 0
          %817 = vmatpush1.bf16.msra.mxu0 0
          %818 = vmatprep.subr.bf16.mxu0 0
          %819 = vmatpush1.bf16.msra.mxu0 0
          %820 = vmatprep.subr.bf16.mxu0 0
          %821 = vmatpush1.bf16.msra.mxu0 0
          %822 = vmatprep.subr.bf16.mxu0 0
          %823 = vmatpush1.bf16.msra.mxu0 0
          %824 = vmatprep.subr.bf16.mxu0 0
          %825 = vmatpush1.bf16.msra.mxu0 0
          %826 = vmatprep.subr.bf16.mxu0 0
          %827 = vmatpush1.bf16.msra.mxu0 0
          %828 = vmatprep.subr.bf16.mxu0 0
          %829 = vmatpush1.bf16.msra.mxu0 0
          %830 = vmatprep.subr.bf16.mxu0 0
          %831 = vmatpush1.bf16.msra.mxu0 0
          %832 = vmatprep.subr.bf16.mxu0 0
          %833 = vmatpush1.bf16.msra.mxu0 0
          %834 = vmatprep.subr.bf16.mxu0 0
          %835 = vmatpush1.bf16.msra.mxu0 0
          %836 = vmatprep.subr.bf16.mxu0 0
          %837 = vmatpush1.bf16.msra.mxu0 0
          %838 = vmatprep.subr.bf16.mxu0 0
          %839 = vmatpush1.bf16.msra.mxu0 0
          %840 = vmatprep.mubr.bf16.mxu0 0
          %841 = vmatmul.mubr.bf16.gmra.mrb[0].mxu0 %v800
          %v842 = vpop.f32.mrb[0].mxu0
          %v843 = vadd.f32 0.0, %v842
          %v844 = vpop.f32.mrb[0].mxu0
          %v845 = vadd.f32 0.0, %v844
          %v846 = vpop.f32.mrb[0].mxu0
          %v847 = vpop.f32.mrb[0].mxu0
          %848 = vdwg.mxu0
          %v849 = vadd.f32 %v793, %v843
          %v850 = vadd.f32 %v794, %v845
          %v851 = vpack.c.bf16 %v737, %v737
          %v852 = vpack.c.bf16 %v738, %v738
          %s853 = scalar_lea.vmem %s1, 32
          %v854 = vld [vmem:[%s853] sm:$0xf]
          %v856 = vsel %vm366, %v854, 0
          %v859 = vsel %vm370, %v851, 0
          %v862 = vsel %vm370, %v852, 0
          %864 = vmatprep.subr.bf16.mxu0 %v862
          %865 = vmatpush1.bf16.msra.mxu0 %v859
          %866 = vmatprep.subr.bf16.mxu0 0
          %867 = vmatpush1.bf16.msra.mxu0 0
          %868 = vmatprep.subr.bf16.mxu0 0
          %869 = vmatpush1.bf16.msra.mxu0 0
          %870 = vmatprep.subr.bf16.mxu0 0
          %871 = vmatpush1.bf16.msra.mxu0 0
          %872 = vmatprep.subr.bf16.mxu0 0
          %873 = vmatpush1.bf16.msra.mxu0 0
          %874 = vmatprep.subr.bf16.mxu0 0
          %875 = vmatpush1.bf16.msra.mxu0 0
          %876 = vmatprep.subr.bf16.mxu0 0
          %877 = vmatpush1.bf16.msra.mxu0 0
          %878 = vmatprep.subr.bf16.mxu0 0
          %879 = vmatpush1.bf16.msra.mxu0 0
          %880 = vmatprep.subr.bf16.mxu0 0
          %881 = vmatpush1.bf16.msra.mxu0 0
          %882 = vmatprep.subr.bf16.mxu0 0
          %883 = vmatpush1.bf16.msra.mxu0 0
          %884 = vmatprep.subr.bf16.mxu0 0
          %885 = vmatpush1.bf16.msra.mxu0 0
          %886 = vmatprep.subr.bf16.mxu0 0
          %887 = vmatpush1.bf16.msra.mxu0 0
          %888 = vmatprep.subr.bf16.mxu0 0
          %889 = vmatpush1.bf16.msra.mxu0 0
          %890 = vmatprep.subr.bf16.mxu0 0
          %891 = vmatpush1.bf16.msra.mxu0 0
          %892 = vmatprep.subr.bf16.mxu0 0
          %893 = vmatpush1.bf16.msra.mxu0 0
          %894 = vmatprep.subr.bf16.mxu0 0
          %895 = vmatpush1.bf16.msra.mxu0 0
          %896 = vmatprep.mubr.bf16.mxu0 0
          %897 = vmatmul.mubr.bf16.gmra.mrb[0].mxu0 %v856
          %v898 = vpop.f32.mrb[0].mxu0
          %v899 = vadd.f32 0.0, %v898
          %v900 = vpop.f32.mrb[0].mxu0
          %v901 = vadd.f32 0.0, %v900
          %v902 = vpop.f32.mrb[0].mxu0
          %v903 = vpop.f32.mrb[0].mxu0
          %904 = vdwg.mxu0
          %v905 = vadd.f32 %v849, %v899
          %v906 = vadd.f32 %v850, %v901
          %908 = vset.pattern.permute.xlu0 0
          %909 = vperm.xlu0 %908, %v290
          %v910 = vpop.permute.xlu0 %909
          %v912 = vadd.f32 %v905, %v910
          %v913 = vadd.f32 %v906, %v910
          %v914 = vadd.f32 %v912, %v913
          %915 = vadd.xlane.f32.xlu0 %v914
          %v916 = vpop.xlane.xlu0 %915
          %v917 = vmul.f32 %v916, 0.00390625
          %v918 = vsub.f32 %v912, %v917
          %v919 = vsub.f32 %v913, %v917
          %v920 = vmul.f32 %v918, %v918
          %v921 = vmul.f32 %v919, %v919
          %v922 = vadd.f32 %v920, %v921
          %923 = vadd.xlane.f32.xlu0 %v922
          %v924 = vpop.xlane.xlu0 %923
          %v925 = vmul.f32 %v924, 0.00390625
          %v926 = vadd.f32 %v925, 1e-05
          %v927 = vrsqrt.pop %v926
          %v928 = vmul.f32 %v918, %v927
          %v929 = vmul.f32 %v919, %v927
          %v930 = vmax.f32 %v928, 0.0
          %v931 = vmax.f32 %v929, 0.0
          %v932 = vpack.c.bf16 %v930, %v930
          %v933 = vpack.c.bf16 %v931, %v931
          %v936 = vunpack.c.l.b16 %v932
          %v937 = vunpack.c.l.b16 %v933
          %v938 = vpack.c.b16 %v937, %v936
          %940 = vst [vmem:[#allocation2] sm:$0xff] %v938
        $region44: #{tpu_custom_call.1} parent=39 // pred_fallthru
          _
        %v941 = vld [vmem:[#allocation2] sm:$0xff]
        %v942 = vunpack.c.l.bf16 %v941
        %v943 = vunpack.c.h.bf16 %v941
        %v944 = vld [vmem:[%s270] sm:$0xff]
        %946 = vrot.lane.b32.xlu0 %v943, 16
        %v947 = vpop.permute.xlu0 %946
        %950 = vrot.lane.b32.xlu0 %v942, 16
        %v951 = vpop.permute.xlu0 %950
        %vm952 = vcmask 130048
        %v953 = vsel %vm952, %v951, %v947
        %v956 = vsel %vm952, %v947, %v951
        %957 = vrot.lane.b32.xlu0 %v942, 112
        %v958 = vpop.permute.xlu0 %957
        %959 = vrot.lane.b32.xlu0 %v943, 112
        %v960 = vpop.permute.xlu0 %959
        %vm961 = vcmask 916480
        %v962 = vsel %vm961, %v958, %v960
        %v966 = vsel %vm961, %v960, %v958
        %v967 = vsel %vm281, 1, 0
        %v968 = vsel %vm282, 1, 0
        %vm969 = vcmp.eq.s32.totalorder %v967, 1
        %vm970 = vcmp.eq.s32.totalorder %v968, 1
        %v971 = vsel %vm969, %v962, %v956
        %v972 = vsel %vm970, %v966, %v953
        %v973 = vsel %vm283, 1, 0
        %v974 = vsel %vm284, 1, 0
        %vm975 = vcmp.eq.s32.totalorder %v973, 1
        %vm976 = vcmp.eq.s32.totalorder %v974, 1
        %v977 = vsel %vm975, %v956, %v962
        %v978 = vsel %vm976, %v953, %v966
        %980 = vrot.lane.b32.xlu0 %v972, 1
        %v981 = vpop.permute.xlu0 %980
        %984 = vrot.lane.b32.xlu0 %v971, 1
        %v985 = vpop.permute.xlu0 %984
        %vm986 = vcmask 7168
        %v987 = vsel %vm986, %v985, %v981
        %v990 = vsel %vm986, %v981, %v985
        %991 = vrot.lane.b32.xlu0 %v971, 127
        %v992 = vpop.permute.xlu0 %991
        %993 = vrot.lane.b32.xlu0 %v972, 127
        %v994 = vpop.permute.xlu0 %993
        %vm995 = vcmask 1039360
        %v996 = vsel %vm995, %v992, %v994
        %v1000 = vsel %vm995, %v994, %v992
        %v1001 = vsel %vm277, 1, 0
        %v1002 = vsel %vm278, 1, 0
        %vm1003 = vcmp.eq.s32.totalorder %v1001, 1
        %vm1004 = vcmp.eq.s32.totalorder %v1002, 1
        %v1005 = vsel %vm1003, %v996, %v990
        %v1006 = vsel %vm1004, %v1000, %v987
        %v1007 = vsel %vm279, 1, 0
        %v1008 = vsel %vm280, 1, 0
        %vm1009 = vcmp.eq.s32.totalorder %v1007, 1
        %vm1010 = vcmp.eq.s32.totalorder %v1008, 1
        %v1011 = vsel %vm1009, %v990, %v996
        %v1012 = vsel %vm1010, %v987, %v1000
        %v1013 = vpack.c.bf16 %v1005, %v1005
        %v1014 = vpack.c.bf16 %v1006, %v1006
        %v1015 = vld [vmem:[%s266] sm:$0xf]
        %v1016 = vpack.c.bf16 %v971, %v971
        %v1017 = vpack.c.bf16 %v972, %v972
        %s1018 = scalar_lea.vmem %s266, 4
        %v1019 = vld [vmem:[%s1018] sm:$0xf]
        %vm1020 = vcmask 64512
        %v1022 = vsel %vm1020, %v1019, 0
        %vm1024 = vcmask 1043456
        %v1026 = vsel %vm1024, %v1016, 0
        %v1029 = vsel %vm1024, %v1017, 0
        %1031 = vmatprep.subr.bf16.mxu0 %v1029
        %1032 = vmatpush1.bf16.msra.mxu0 %v1026
        %1033 = vmatprep.subr.bf16.mxu0 0
        %1034 = vmatpush1.bf16.msra.mxu0 0
        %1035 = vmatprep.subr.bf16.mxu0 0
        %1036 = vmatpush1.bf16.msra.mxu0 0
        %1037 = vmatprep.subr.bf16.mxu0 0
        %1038 = vmatpush1.bf16.msra.mxu0 0
        %1039 = vmatprep.subr.bf16.mxu0 0
        %1040 = vmatpush1.bf16.msra.mxu0 0
        %1041 = vmatprep.subr.bf16.mxu0 0
        %1042 = vmatpush1.bf16.msra.mxu0 0
        %1043 = vmatprep.subr.bf16.mxu0 0
        %1044 = vmatpush1.bf16.msra.mxu0 0
        %1045 = vmatprep.subr.bf16.mxu0 0
        %1046 = vmatpush1.bf16.msra.mxu0 0
        %1047 = vmatprep.subr.bf16.mxu0 0
        %1048 = vmatpush1.bf16.msra.mxu0 0
        %1049 = vmatprep.subr.bf16.mxu0 0
        %1050 = vmatpush1.bf16.msra.mxu0 0
        %1051 = vmatprep.subr.bf16.mxu0 0
        %1052 = vmatpush1.bf16.msra.mxu0 0
        %1053 = vmatprep.subr.bf16.mxu0 0
        %1054 = vmatpush1.bf16.msra.mxu0 0
        %1055 = vmatprep.subr.bf16.mxu0 0
        %1056 = vmatpush1.bf16.msra.mxu0 0
        %1057 = vmatprep.subr.bf16.mxu0 0
        %1058 = vmatpush1.bf16.msra.mxu0 0
        %1059 = vmatprep.subr.bf16.mxu0 0
        %1060 = vmatpush1.bf16.msra.mxu0 0
        %1061 = vmatprep.subr.bf16.mxu0 0
        %1062 = vmatpush1.bf16.msra.mxu0 0
        %1063 = vmatprep.mubr.bf16.mxu0 0
        %1064 = vmatmul.mubr.bf16.gmra.mrb[0].mxu0 %v1022
        %v1065 = vpop.f32.mrb[0].mxu0
        %v1066 = vadd.f32 0.0, %v1065
        %v1067 = vpop.f32.mrb[0].mxu0
        %v1068 = vadd.f32 0.0, %v1067
        %v1069 = vpop.f32.mrb[0].mxu0
        %v1070 = vpop.f32.mrb[0].mxu0
        %1071 = vdwg.mxu0
        %v1073 = vsel %vm1020, %v1015, 0
        %v1076 = vsel %vm1024, %v1013, 0
        %v1079 = vsel %vm1024, %v1014, 0
        %1081 = vmatprep.subr.bf16.mxu0 %v1079
        %1082 = vmatpush1.bf16.msra.mxu0 %v1076
        %1083 = vmatprep.subr.bf16.mxu0 0
        %1084 = vmatpush1.bf16.msra.mxu0 0
        %1085 = vmatprep.subr.bf16.mxu0 0
        %1086 = vmatpush1.bf16.msra.mxu0 0
        %1087 = vmatprep.subr.bf16.mxu0 0
        %1088 = vmatpush1.bf16.msra.mxu0 0
        %1089 = vmatprep.subr.bf16.mxu0 0
        %1090 = vmatpush1.bf16.msra.mxu0 0
        %1091 = vmatprep.subr.bf16.mxu0 0
        %1092 = vmatpush1.bf16.msra.mxu0 0
        %1093 = vmatprep.subr.bf16.mxu0 0
        %1094 = vmatpush1.bf16.msra.mxu0 0
        %1095 = vmatprep.subr.bf16.mxu0 0
        %1096 = vmatpush1.bf16.msra.mxu0 0
        %1097 = vmatprep.subr.bf16.mxu0 0
        %1098 = vmatpush1.bf16.msra.mxu0 0
        %1099 = vmatprep.subr.bf16.mxu0 0
        %1100 = vmatpush1.bf16.msra.mxu0 0
        %1101 = vmatprep.subr.bf16.mxu0 0
        %1102 = vmatpush1.bf16.msra.mxu0 0
        %1103 = vmatprep.subr.bf16.mxu0 0
        %1104 = vmatpush1.bf16.msra.mxu0 0
        %1105 = vmatprep.subr.bf16.mxu0 0
        %1106 = vmatpush1.bf16.msra.mxu0 0
        %1107 = vmatprep.subr.bf16.mxu0 0
        %1108 = vmatpush1.bf16.msra.mxu0 0
        %1109 = vmatprep.subr.bf16.mxu0 0
        %1110 = vmatpush1.bf16.msra.mxu0 0
        %1111 = vmatprep.subr.bf16.mxu0 0
        %1112 = vmatpush1.bf16.msra.mxu0 0
        %1113 = vmatprep.mubr.bf16.mxu0 0
        %1114 = vmatmul.mubr.bf16.gmra.mrb[0].mxu0 %v1073
        %v1115 = vpop.f32.mrb[0].mxu0
        %v1116 = vadd.f32 %v1066, %v1115
        %v1117 = vpop.f32.mrb[0].mxu0
        %v1118 = vadd.f32 %v1068, %v1117
        %v1119 = vpop.f32.mrb[0].mxu0
        %v1120 = vpop.f32.mrb[0].mxu0
        %1121 = vdwg.mxu0
        %v1122 = vpack.c.bf16 %v1011, %v1011
        %v1123 = vpack.c.bf16 %v1012, %v1012
        %s1124 = scalar_lea.vmem %s266, 8
        %v1125 = vld [vmem:[%s1124] sm:$0xf]
        %v1127 = vsel %vm1020, %v1125, 0
        %v1130 = vsel %vm1024, %v1122, 0
        %v1133 = vsel %vm1024, %v1123, 0
        %1135 = vmatprep.subr.bf16.mxu0 %v1133
        %1136 = vmatpush1.bf16.msra.mxu0 %v1130
        %1137 = vmatprep.subr.bf16.mxu0 0
        %1138 = vmatpush1.bf16.msra.mxu0 0
        %1139 = vmatprep.subr.bf16.mxu0 0
        %1140 = vmatpush1.bf16.msra.mxu0 0
        %1141 = vmatprep.subr.bf16.mxu0 0
        %1142 = vmatpush1.bf16.msra.mxu0 0
        %1143 = vmatprep.subr.bf16.mxu0 0
        %1144 = vmatpush1.bf16.msra.mxu0 0
        %1145 = vmatprep.subr.bf16.mxu0 0
        %1146 = vmatpush1.bf16.msra.mxu0 0
        %1147 = vmatprep.subr.bf16.mxu0 0
        %1148 = vmatpush1.bf16.msra.mxu0 0
        %1149 = vmatprep.subr.bf16.mxu0 0
        %1150 = vmatpush1.bf16.msra.mxu0 0
        %1151 = vmatprep.subr.bf16.mxu0 0
        %1152 = vmatpush1.bf16.msra.mxu0 0
        %1153 = vmatprep.subr.bf16.mxu0 0
        %1154 = vmatpush1.bf16.msra.mxu0 0
        %1155 = vmatprep.subr.bf16.mxu0 0
        %1156 = vmatpush1.bf16.msra.mxu0 0
        %1157 = vmatprep.subr.bf16.mxu0 0
        %1158 = vmatpush1.bf16.msra.mxu0 0
        %1159 = vmatprep.subr.bf16.mxu0 0
        %1160 = vmatpush1.bf16.msra.mxu0 0
        %1161 = vmatprep.subr.bf16.mxu0 0
        %1162 = vmatpush1.bf16.msra.mxu0 0
        %1163 = vmatprep.subr.bf16.mxu0 0
        %1164 = vmatpush1.bf16.msra.mxu0 0
        %1165 = vmatprep.subr.bf16.mxu0 0
        %1166 = vmatpush1.bf16.msra.mxu0 0
        %1167 = vmatprep.mubr.bf16.mxu0 0
        %1168 = vmatmul.mubr.bf16.gmra.mrb[0].mxu0 %v1127
        %v1169 = vpop.f32.mrb[0].mxu0
        %v1170 = vadd.f32 0.0, %v1169
        %v1171 = vpop.f32.mrb[0].mxu0
        %v1172 = vadd.f32 0.0, %v1171
        %v1173 = vpop.f32.mrb[0].mxu0
        %v1174 = vpop.f32.mrb[0].mxu0
        %1175 = vdwg.mxu0
        %v1176 = vadd.f32 %v1116, %v1170
        %v1177 = vadd.f32 %v1118, %v1172
        %1178 = vrot.lane.b32.xlu0 %v943, 1
        %v1179 = vpop.permute.xlu0 %1178
        %1181 = vrot.lane.b32.xlu0 %v942, 1
        %v1182 = vpop.permute.xlu0 %1181
        %v1183 = vsel %vm986, %v1182, %v1179
        %v1186 = vsel %vm986, %v1179, %v1182
        %1187 = vrot.lane.b32.xlu0 %v942, 127
        %v1188 = vpop.permute.xlu0 %1187
        %1189 = vrot.lane.b32.xlu0 %v943, 127
        %v1190 = vpop.permute.xlu0 %1189
        %v1191 = vsel %vm995, %v1188, %v1190
        %v1195 = vsel %vm995, %v1190, %v1188
        %v1196 = vsel %vm1003, %v1191, %v1186
        %v1197 = vsel %vm1004, %v1195, %v1183
        %v1198 = vsel %vm1009, %v1186, %v1191
        %v1199 = vsel %vm1010, %v1183, %v1195
        %v1200 = vpack.c.bf16 %v1196, %v1196
        %v1201 = vpack.c.bf16 %v1197, %v1197
        %s1202 = scalar_lea.vmem %s266, 12
        %v1203 = vld [vmem:[%s1202] sm:$0xf]
        %v1205 = vsel %vm1020, %v1203, 0
        %v1208 = vsel %vm1024, %v1200, 0
        %v1211 = vsel %vm1024, %v1201, 0
        %1213 = vmatprep.subr.bf16.mxu0 %v1211
        %1214 = vmatpush1.bf16.msra.mxu0 %v1208
        %1215 = vmatprep.subr.bf16.mxu0 0
        %1216 = vmatpush1.bf16.msra.mxu0 0
        %1217 = vmatprep.subr.bf16.mxu0 0
        %1218 = vmatpush1.bf16.msra.mxu0 0
        %1219 = vmatprep.subr.bf16.mxu0 0
        %1220 = vmatpush1.bf16.msra.mxu0 0
        %1221 = vmatprep.subr.bf16.mxu0 0
        %1222 = vmatpush1.bf16.msra.mxu0 0
        %1223 = vmatprep.subr.bf16.mxu0 0
        %1224 = vmatpush1.bf16.msra.mxu0 0
        %1225 = vmatprep.subr.bf16.mxu0 0
        %1226 = vmatpush1.bf16.msra.mxu0 0
        %1227 = vmatprep.subr.bf16.mxu0 0
        %1228 = vmatpush1.bf16.msra.mxu0 0
        %1229 = vmatprep.subr.bf16.mxu0 0
        %1230 = vmatpush1.bf16.msra.mxu0 0
        %1231 = vmatprep.subr.bf16.mxu0 0
        %1232 = vmatpush1.bf16.msra.mxu0 0
        %1233 = vmatprep.subr.bf16.mxu0 0
        %1234 = vmatpush1.bf16.msra.mxu0 0
        %1235 = vmatprep.subr.bf16.mxu0 0
        %1236 = vmatpush1.bf16.msra.mxu0 0
        %1237 = vmatprep.subr.bf16.mxu0 0
        %1238 = vmatpush1.bf16.msra.mxu0 0
        %1239 = vmatprep.subr.bf16.mxu0 0
        %1240 = vmatpush1.bf16.msra.mxu0 0
        %1241 = vmatprep.subr.bf16.mxu0 0
        %1242 = vmatpush1.bf16.msra.mxu0 0
        %1243 = vmatprep.subr.bf16.mxu0 0
        %1244 = vmatpush1.bf16.msra.mxu0 0
        %1245 = vmatprep.mubr.bf16.mxu0 0
        %1246 = vmatmul.mubr.bf16.gmra.mrb[0].mxu0 %v1205
        %v1247 = vpop.f32.mrb[0].mxu0
        %v1248 = vadd.f32 0.0, %v1247
        %v1249 = vpop.f32.mrb[0].mxu0
        %v1250 = vadd.f32 0.0, %v1249
        %v1251 = vpop.f32.mrb[0].mxu0
        %v1252 = vpop.f32.mrb[0].mxu0
        %1253 = vdwg.mxu0
        %v1254 = vadd.f32 %v1176, %v1248
        %v1255 = vadd.f32 %v1177, %v1250
        %s1256 = scalar_lea.vmem %s266, 16
        %v1257 = vld [vmem:[%s1256] sm:$0xf]
        %v1259 = vunpack.c.l.b16 %v941
        %v1260 = vunpack.c.h.b16 %v941
        %v1261 = vpack.c.b16 %v1259, %v1259
        %v1262 = vpack.c.b16 %v1260, %v1260
        %v1264 = vsel %vm1020, %v1257, 0
        %v1267 = vsel %vm1024, %v1261, 0
        %v1270 = vsel %vm1024, %v1262, 0
        %1272 = vmatprep.subr.bf16.mxu0 %v1270
        %1273 = vmatpush1.bf16.msra.mxu0 %v1267
        %1274 = vmatprep.subr.bf16.mxu0 0
        %1275 = vmatpush1.bf16.msra.mxu0 0
        %1276 = vmatprep.subr.bf16.mxu0 0
        %1277 = vmatpush1.bf16.msra.mxu0 0
        %1278 = vmatprep.subr.bf16.mxu0 0
        %1279 = vmatpush1.bf16.msra.mxu0 0
        %1280 = vmatprep.subr.bf16.mxu0 0
        %1281 = vmatpush1.bf16.msra.mxu0 0
        %1282 = vmatprep.subr.bf16.mxu0 0
        %1283 = vmatpush1.bf16.msra.mxu0 0
        %1284 = vmatprep.subr.bf16.mxu0 0
        %1285 = vmatpush1.bf16.msra.mxu0 0
        %1286 = vmatprep.subr.bf16.mxu0 0
        %1287 = vmatpush1.bf16.msra.mxu0 0
        %1288 = vmatprep.subr.bf16.mxu0 0
        %1289 = vmatpush1.bf16.msra.mxu0 0
        %1290 = vmatprep.subr.bf16.mxu0 0
        %1291 = vmatpush1.bf16.msra.mxu0 0
        %1292 = vmatprep.subr.bf16.mxu0 0
        %1293 = vmatpush1.bf16.msra.mxu0 0
        %1294 = vmatprep.subr.bf16.mxu0 0
        %1295 = vmatpush1.bf16.msra.mxu0 0
        %1296 = vmatprep.subr.bf16.mxu0 0
        %1297 = vmatpush1.bf16.msra.mxu0 0
        %1298 = vmatprep.subr.bf16.mxu0 0
        %1299 = vmatpush1.bf16.msra.mxu0 0
        %1300 = vmatprep.subr.bf16.mxu0 0
        %1301 = vmatpush1.bf16.msra.mxu0 0
        %1302 = vmatprep.subr.bf16.mxu0 0
        %1303 = vmatpush1.bf16.msra.mxu0 0
        %1304 = vmatprep.mubr.bf16.mxu0 0
        %1305 = vmatmul.mubr.bf16.gmra.mrb[0].mxu0 %v1264
        %v1306 = vpop.f32.mrb[0].mxu0
        %v1307 = vadd.f32 0.0, %v1306
        %v1308 = vpop.f32.mrb[0].mxu0
        %v1309 = vadd.f32 0.0, %v1308
        %v1310 = vpop.f32.mrb[0].mxu0
        %v1311 = vpop.f32.mrb[0].mxu0
        %1312 = vdwg.mxu0
        %v1313 = vadd.f32 %v1254, %v1307
        %v1314 = vadd.f32 %v1255, %v1309
        %v1315 = vpack.c.bf16 %v1198, %v1198
        %v1316 = vpack.c.bf16 %v1199, %v1199
        %s1317 = scalar_lea.vmem %s266, 20
        %v1318 = vld [vmem:[%s1317] sm:$0xf]
        %v1320 = vsel %vm1020, %v1318, 0
        %v1323 = vsel %vm1024, %v1315, 0
        %v1326 = vsel %vm1024, %v1316, 0
        %1328 = vmatprep.subr.bf16.mxu0 %v1326
        %1329 = vmatpush1.bf16.msra.mxu0 %v1323
        %1330 = vmatprep.subr.bf16.mxu0 0
        %1331 = vmatpush1.bf16.msra.mxu0 0
        %1332 = vmatprep.subr.bf16.mxu0 0
        %1333 = vmatpush1.bf16.msra.mxu0 0
        %1334 = vmatprep.subr.bf16.mxu0 0
        %1335 = vmatpush1.bf16.msra.mxu0 0
        %1336 = vmatprep.subr.bf16.mxu0 0
        %1337 = vmatpush1.bf16.msra.mxu0 0
        %1338 = vmatprep.subr.bf16.mxu0 0
        %1339 = vmatpush1.bf16.msra.mxu0 0
        %1340 = vmatprep.subr.bf16.mxu0 0
        %1341 = vmatpush1.bf16.msra.mxu0 0
        %1342 = vmatprep.subr.bf16.mxu0 0
        %1343 = vmatpush1.bf16.msra.mxu0 0
        %1344 = vmatprep.subr.bf16.mxu0 0
        %1345 = vmatpush1.bf16.msra.mxu0 0
        %1346 = vmatprep.subr.bf16.mxu0 0
        %1347 = vmatpush1.bf16.msra.mxu0 0
        %1348 = vmatprep.subr.bf16.mxu0 0
        %1349 = vmatpush1.bf16.msra.mxu0 0
        %1350 = vmatprep.subr.bf16.mxu0 0
        %1351 = vmatpush1.bf16.msra.mxu0 0
        %1352 = vmatprep.subr.bf16.mxu0 0
        %1353 = vmatpush1.bf16.msra.mxu0 0
        %1354 = vmatprep.subr.bf16.mxu0 0
        %1355 = vmatpush1.bf16.msra.mxu0 0
        %1356 = vmatprep.subr.bf16.mxu0 0
        %1357 = vmatpush1.bf16.msra.mxu0 0
        %1358 = vmatprep.subr.bf16.mxu0 0
        %1359 = vmatpush1.bf16.msra.mxu0 0
        %1360 = vmatprep.mubr.bf16.mxu0 0
        %1361 = vmatmul.mubr.bf16.gmra.mrb[0].mxu0 %v1320
        %v1362 = vpop.f32.mrb[0].mxu0
        %v1363 = vadd.f32 0.0, %v1362
        %v1364 = vpop.f32.mrb[0].mxu0
        %v1365 = vadd.f32 0.0, %v1364
        %v1366 = vpop.f32.mrb[0].mxu0
        %v1367 = vpop.f32.mrb[0].mxu0
        %1368 = vdwg.mxu0
        %v1369 = vadd.f32 %v1313, %v1363
        %v1370 = vadd.f32 %v1314, %v1365
        %1372 = vrot.lane.b32.xlu0 %v978, 1
        %v1373 = vpop.permute.xlu0 %1372
        %1376 = vrot.lane.b32.xlu0 %v977, 1
        %v1377 = vpop.permute.xlu0 %1376
        %v1378 = vsel %vm986, %v1377, %v1373
        %v1381 = vsel %vm986, %v1373, %v1377
        %1382 = vrot.lane.b32.xlu0 %v977, 127
        %v1383 = vpop.permute.xlu0 %1382
        %1384 = vrot.lane.b32.xlu0 %v978, 127
        %v1385 = vpop.permute.xlu0 %1384
        %v1386 = vsel %vm995, %v1383, %v1385
        %v1390 = vsel %vm995, %v1385, %v1383
        %v1391 = vsel %vm1003, %v1386, %v1381
        %v1392 = vsel %vm1004, %v1390, %v1378
        %v1393 = vsel %vm1009, %v1381, %v1386
        %v1394 = vsel %vm1010, %v1378, %v1390
        %v1395 = vpack.c.bf16 %v1391, %v1391
        %v1396 = vpack.c.bf16 %v1392, %v1392
        %s1397 = scalar_lea.vmem %s266, 24
        %v1398 = vld [vmem:[%s1397] sm:$0xf]
        %v1400 = vsel %vm1020, %v1398, 0
        %v1403 = vsel %vm1024, %v1395, 0
        %v1406 = vsel %vm1024, %v1396, 0
        %1408 = vmatprep.subr.bf16.mxu0 %v1406
        %1409 = vmatpush1.bf16.msra.mxu0 %v1403
        %1410 = vmatprep.subr.bf16.mxu0 0
        %1411 = vmatpush1.bf16.msra.mxu0 0
        %1412 = vmatprep.subr.bf16.mxu0 0
        %1413 = vmatpush1.bf16.msra.mxu0 0
        %1414 = vmatprep.subr.bf16.mxu0 0
        %1415 = vmatpush1.bf16.msra.mxu0 0
        %1416 = vmatprep.subr.bf16.mxu0 0
        %1417 = vmatpush1.bf16.msra.mxu0 0
        %1418 = vmatprep.subr.bf16.mxu0 0
        %1419 = vmatpush1.bf16.msra.mxu0 0
        %1420 = vmatprep.subr.bf16.mxu0 0
        %1421 = vmatpush1.bf16.msra.mxu0 0
        %1422 = vmatprep.subr.bf16.mxu0 0
        %1423 = vmatpush1.bf16.msra.mxu0 0
        %1424 = vmatprep.subr.bf16.mxu0 0
        %1425 = vmatpush1.bf16.msra.mxu0 0
        %1426 = vmatprep.subr.bf16.mxu0 0
        %1427 = vmatpush1.bf16.msra.mxu0 0
        %1428 = vmatprep.subr.bf16.mxu0 0
        %1429 = vmatpush1.bf16.msra.mxu0 0
        %1430 = vmatprep.subr.bf16.mxu0 0
        %1431 = vmatpush1.bf16.msra.mxu0 0
        %1432 = vmatprep.subr.bf16.mxu0 0
        %1433 = vmatpush1.bf16.msra.mxu0 0
        %1434 = vmatprep.subr.bf16.mxu0 0
        %1435 = vmatpush1.bf16.msra.mxu0 0
        %1436 = vmatprep.subr.bf16.mxu0 0
        %1437 = vmatpush1.bf16.msra.mxu0 0
        %1438 = vmatprep.subr.bf16.mxu0 0
        %1439 = vmatpush1.bf16.msra.mxu0 0
        %1440 = vmatprep.mubr.bf16.mxu0 0
        %1441 = vmatmul.mubr.bf16.gmra.mrb[0].mxu0 %v1400
        %v1442 = vpop.f32.mrb[0].mxu0
        %v1443 = vadd.f32 0.0, %v1442
        %v1444 = vpop.f32.mrb[0].mxu0
        %v1445 = vadd.f32 0.0, %v1444
        %v1446 = vpop.f32.mrb[0].mxu0
        %v1447 = vpop.f32.mrb[0].mxu0
        %1448 = vdwg.mxu0
        %v1449 = vadd.f32 %v1369, %v1443
        %v1450 = vadd.f32 %v1370, %v1445
        %v1451 = vpack.c.bf16 %v977, %v977
        %v1452 = vpack.c.bf16 %v978, %v978
        %s1453 = scalar_lea.vmem %s266, 28
        %v1454 = vld [vmem:[%s1453] sm:$0xf]
        %v1456 = vsel %vm1020, %v1454, 0
        %v1459 = vsel %vm1024, %v1451, 0
        %v1462 = vsel %vm1024, %v1452, 0
        %1464 = vmatprep.subr.bf16.mxu0 %v1462
        %1465 = vmatpush1.bf16.msra.mxu0 %v1459
        %1466 = vmatprep.subr.bf16.mxu0 0
        %1467 = vmatpush1.bf16.msra.mxu0 0
        %1468 = vmatprep.subr.bf16.mxu0 0
        %1469 = vmatpush1.bf16.msra.mxu0 0
        %1470 = vmatprep.subr.bf16.mxu0 0
        %1471 = vmatpush1.bf16.msra.mxu0 0
        %1472 = vmatprep.subr.bf16.mxu0 0
        %1473 = vmatpush1.bf16.msra.mxu0 0
        %1474 = vmatprep.subr.bf16.mxu0 0
        %1475 = vmatpush1.bf16.msra.mxu0 0
        %1476 = vmatprep.subr.bf16.mxu0 0
        %1477 = vmatpush1.bf16.msra.mxu0 0
        %1478 = vmatprep.subr.bf16.mxu0 0
        %1479 = vmatpush1.bf16.msra.mxu0 0
        %1480 = vmatprep.subr.bf16.mxu0 0
        %1481 = vmatpush1.bf16.msra.mxu0 0
        %1482 = vmatprep.subr.bf16.mxu0 0
        %1483 = vmatpush1.bf16.msra.mxu0 0
        %1484 = vmatprep.subr.bf16.mxu0 0
        %1485 = vmatpush1.bf16.msra.mxu0 0
        %1486 = vmatprep.subr.bf16.mxu0 0
        %1487 = vmatpush1.bf16.msra.mxu0 0
        %1488 = vmatprep.subr.bf16.mxu0 0
        %1489 = vmatpush1.bf16.msra.mxu0 0
        %1490 = vmatprep.subr.bf16.mxu0 0
        %1491 = vmatpush1.bf16.msra.mxu0 0
        %1492 = vmatprep.subr.bf16.mxu0 0
        %1493 = vmatpush1.bf16.msra.mxu0 0
        %1494 = vmatprep.subr.bf16.mxu0 0
        %1495 = vmatpush1.bf16.msra.mxu0 0
        %1496 = vmatprep.mubr.bf16.mxu0 0
        %1497 = vmatmul.mubr.bf16.gmra.mrb[0].mxu0 %v1456
        %v1498 = vpop.f32.mrb[0].mxu0
        %v1499 = vadd.f32 0.0, %v1498
        %v1500 = vpop.f32.mrb[0].mxu0
        %v1501 = vadd.f32 0.0, %v1500
        %v1502 = vpop.f32.mrb[0].mxu0
        %v1503 = vpop.f32.mrb[0].mxu0
        %1504 = vdwg.mxu0
        %v1505 = vadd.f32 %v1449, %v1499
        %v1506 = vadd.f32 %v1450, %v1501
        %v1507 = vpack.c.bf16 %v1393, %v1393
        %v1508 = vpack.c.bf16 %v1394, %v1394
        %s1509 = scalar_lea.vmem %s266, 32
        %v1510 = vld [vmem:[%s1509] sm:$0xf]
        %v1512 = vsel %vm1020, %v1510, 0
        %v1515 = vsel %vm1024, %v1507, 0
        %v1518 = vsel %vm1024, %v1508, 0
        %1520 = vmatprep.subr.bf16.mxu0 %v1518
        %1521 = vmatpush1.bf16.msra.mxu0 %v1515
        %1522 = vmatprep.subr.bf16.mxu0 0
        %1523 = vmatpush1.bf16.msra.mxu0 0
        %1524 = vmatprep.subr.bf16.mxu0 0
        %1525 = vmatpush1.bf16.msra.mxu0 0
        %1526 = vmatprep.subr.bf16.mxu0 0
        %1527 = vmatpush1.bf16.msra.mxu0 0
        %1528 = vmatprep.subr.bf16.mxu0 0
        %1529 = vmatpush1.bf16.msra.mxu0 0
        %1530 = vmatprep.subr.bf16.mxu0 0
        %1531 = vmatpush1.bf16.msra.mxu0 0
        %1532 = vmatprep.subr.bf16.mxu0 0
        %1533 = vmatpush1.bf16.msra.mxu0 0
        %1534 = vmatprep.subr.bf16.mxu0 0
        %1535 = vmatpush1.bf16.msra.mxu0 0
        %1536 = vmatprep.subr.bf16.mxu0 0
        %1537 = vmatpush1.bf16.msra.mxu0 0
        %1538 = vmatprep.subr.bf16.mxu0 0
        %1539 = vmatpush1.bf16.msra.mxu0 0
        %1540 = vmatprep.subr.bf16.mxu0 0
        %1541 = vmatpush1.bf16.msra.mxu0 0
        %1542 = vmatprep.subr.bf16.mxu0 0
        %1543 = vmatpush1.bf16.msra.mxu0 0
        %1544 = vmatprep.subr.bf16.mxu0 0
        %1545 = vmatpush1.bf16.msra.mxu0 0
        %1546 = vmatprep.subr.bf16.mxu0 0
        %1547 = vmatpush1.bf16.msra.mxu0 0
        %1548 = vmatprep.subr.bf16.mxu0 0
        %1549 = vmatpush1.bf16.msra.mxu0 0
        %1550 = vmatprep.subr.bf16.mxu0 0
        %1551 = vmatpush1.bf16.msra.mxu0 0
        %1552 = vmatprep.mubr.bf16.mxu0 0
        %1553 = vmatmul.mubr.bf16.gmra.mrb[0].mxu0 %v1512
        %v1554 = vpop.f32.mrb[0].mxu0
        %v1555 = vadd.f32 0.0, %v1554
        %v1556 = vpop.f32.mrb[0].mxu0
        %v1557 = vadd.f32 0.0, %v1556
        %v1558 = vpop.f32.mrb[0].mxu0
        %v1559 = vpop.f32.mrb[0].mxu0
        %1560 = vdwg.mxu0
        %v1561 = vadd.f32 %v1505, %v1555
        %v1562 = vadd.f32 %v1506, %v1557
        %1564 = vset.pattern.permute.xlu0 0
        %1565 = vperm.xlu0 %1564, %v944
        %v1566 = vpop.permute.xlu0 %1565
        %v1568 = vadd.f32 %v1561, %v1566
        %v1569 = vadd.f32 %v1562, %v1566
        %v1570 = vadd.f32 %v1568, %v1569
        %1571 = vadd.xlane.f32.xlu0 %v1570
        %v1572 = vpop.xlane.xlu0 %1571
        %v1573 = vmul.f32 %v1572, 0.00390625
        %v1574 = vsub.f32 %v1568, %v1573
        %v1575 = vsub.f32 %v1569, %v1573
        %v1576 = vmul.f32 %v1574, %v1574
        %v1577 = vmul.f32 %v1575, %v1575
        %v1578 = vadd.f32 %v1576, %v1577
        %1579 = vadd.xlane.f32.xlu0 %v1578
        %v1580 = vpop.xlane.xlu0 %1579
        %v1581 = vmul.f32 %v1580, 0.00390625
        %v1582 = vadd.f32 %v1581, 1e-05
        %v1583 = vrsqrt.pop %v1582
        %v1584 = vmul.f32 %v1574, %v1583
        %v1585 = vmul.f32 %v1575, %v1583
        %v1586 = vmax.f32 %v1584, 0.0
        %v1587 = vmax.f32 %v1585, 0.0
        %1588 = vst [vmem:[%s257] sm:$0xff] %v1586
        %1589 = vst [vmem:[%s257 + $0x8] sm:$0xff] %v1587
        %s1590 = sand.u32 %s161, 1
        %s1591 = scalar_lea.sflag [#allocation4], %s1590
        %s1592 = sand.u32 %s161, 1
        %s1593 = smul.addr %s1592, 16
        %s1594 = scalar_lea.vmem [#allocation3], %s1593
        // Predicated region
        $region45: #{tpu_custom_call.1} parent=39 // pred_check
          %p1595 = pneg %p171
        $region46: #{tpu_custom_call.1} parent=39 // pred_check_branch
          %1597 = sbr.rel (%p1595) target = $region48
        $region47: #{tpu_custom_call.1} parent=39 // pred_region
          %s1599 = ssub.s32 256, 256
          %1600 = vsyncadd %s1591, %s1599
          %s1601 = smul.addr %s24, 2
          %s1602 = smul.addr %s23, 2
          %s1603 = sadd.s32 %s1601, %s1602
          %s1604 = smul.addr %s1603, 128
          %s1605 = scalar_lea.hbm %s5, %s1604
          %s1607 = sshll.u32 %s1594, 4
          %s1608 = int_to_ptr.vmem [resolvable:$true] %s1607
          %1610 = dma.vmem_to_hbm [thread:$0]  %s1608, 256, %s1605, %s1591
        $region48: #{tpu_custom_call.1} parent=39 // pred_fallthru
          _
      $region40: #{tpu_custom_call.1} parent=5 // pred_fallthru
        _
      %p1611 = scmp.le.s32.totalorder 2, %s14
      // Predicated region
      $region49: #{tpu_custom_call.1} parent=5 // pred_check
        %p1612 = pneg %p1611
      $region50: #{tpu_custom_call.1} parent=5 // pred_check_branch
        %1614 = sbr.rel (%p1612) target = $region52
      $region51: #{tpu_custom_call.1} parent=5 // pred_region
        %s1615 = ssub.s32 %s14, 2
        // Predicated region
        $region53: #{tpu_custom_call.1} parent=51 // pred_check
          %p1616 = pneg %p177
        $region54: #{tpu_custom_call.1} parent=51 // pred_check_branch
          %1618 = sbr.rel (%p1616) target = $region56
        $region55: #{tpu_custom_call.1} parent=51 // pred_region
          %s1619 = sand.u32 %s162, 1
          %s1620 = scalar_lea.sflag [#allocation4], %s1619
          %s1621 = sand.u32 %s162, 1
          %s1622 = smul.addr %s1621, 16
          %s1623 = scalar_lea.vmem [#allocation3], %s1622
          %1624 = dma.done %s1620, 256
        $region56: #{tpu_custom_call.1} parent=51 // pred_fallthru
          _
      $region52: #{tpu_custom_call.1} parent=5 // pred_fallthru
        _
    $region6: #{tpu_custom_call.1} parent=1 // loop_footer
      %s18 = sadd.s32 1, %s14
    $region7: #{tpu_custom_call.1} parent=1 // loop_footer_branch
      %13 = sbr.rel target = $region3
    $region8: #{tpu_custom_call.1} parent=1 // loop_exit
      _
    %1625 = vsyncpa [#allocation4], 1
    %s1626 = scalar_lea.sflag [#allocation4], 1
    %1627 = vsyncpa %s1626, 1

</llo_original>
